<compile_context>
chip_gen: v5e
topology: v5e:2x2
jax: 0.10.0
libtpu: 0.0.40
codegen_flags: <defaults>
</compile_context>

<pallas_src>
import functools

import numpy as np
import jax
import jax.numpy as jnp
from jax.experimental import pallas as pl
from jax.experimental.pallas import tpu as pltpu


# -----------------------------------------------------------------------------
# Pallas kernel: one grid step = all heads, a chunk of windows, ONE ego agent.
# Keys/values already carry the relation_att / relation_msg projection for the
# ego's type (plane selected by the index_map via scalar prefetch), so the
# kernel is two batched MXU matmuls plus an f32 softmax with an in-kernel bias.
# -----------------------------------------------------------------------------
def _hetero_attn_kernel(types_ref, q_ref, k_ref, v_ref, mask_ref, bias_ref,
                        o_ref, *, xy_blk, heads, n, ln, d, scale):
    # types_ref: (B, M) int32 SMEM  — used only by the index_maps
    # q_ref    : (xy_blk, heads, N,  d)   bf16  ego-agent queries
    # k_ref    : (xy_blk, heads, d,  LN)  bf16  relation-projected keys (LN lane-dense)
    # v_ref    : (xy_blk, heads, d,  LN)  bf16  relation-projected values
    # mask_ref : (xy_blk, LN)             f32   additive key mask (0 / -1e9)
    # bias_ref : (heads, N, LN)           f32   rel-pos bias (grid-constant, resident)
    # o_ref    : (xy_blk, heads, N, d)    bf16
    del types_ref
    g = xy_blk * heads
    q = q_ref[...].reshape(g, n, d)
    k = k_ref[...].reshape(g, d, ln)

    s = jnp.einsum('bqd,bdk->bqk', q, k,
                   preferred_element_type=jnp.float32)            # (g, N, LN) f32
    s = s.reshape(xy_blk, heads, n, ln) * scale
    s = (s + bias_ref[...].reshape(1, heads, n, ln)
           + mask_ref[...].reshape(xy_blk, 1, 1, ln))

    s = s - jnp.max(s, axis=-1, keepdims=True)
    p = jnp.exp(s)                                                 # f32 (v5e-safe)
    denom = jnp.sum(p, axis=-1, keepdims=True)
    attn = (p * pl.reciprocal(denom, approx=True))
    attn = attn.reshape(g, n, ln).astype(v_ref.dtype)

    v = v_ref[...].reshape(g, d, ln)
    out = jnp.einsum('bqk,bdk->bqd', attn, v,
                     preferred_element_type=jnp.float32)           # (g, N, d)
    o_ref[...] = out.reshape(xy_blk, heads, n, d).astype(o_ref.dtype)


# -----------------------------------------------------------------------------
# VMEM-budgeted tile sizing (accounts for (8,128)/(16,128) padding, double
# buffering and the f32 score intermediates).
# -----------------------------------------------------------------------------
def _round_up(x, m):
    return ((x + m - 1) // m) * m


def _per_window_vmem_bytes(heads, n, ln, d):
    ln_l = _round_up(ln, 128)
    q_b = heads * _round_up(n, 16) * 128 * 2          # q block (bf16, d minor padded)
    o_b = q_b                                          # out block
    kv_b = 2 * heads * _round_up(d, 16) * ln_l * 2     # k + v blocks (bf16, LN minor)
    m_b = ln_l * 4                                     # mask row (f32)
    s_b = 2 * heads * _round_up(n, 8) * ln_l * 4       # scores + probs (f32 scratch)
    return 2 * (q_b + o_b + kv_b + m_b) + s_b          # 2x = double buffering


def _choose_xy_block(xy, per_window_bytes, fixed_bytes,
                     budget=32 * 1024 * 1024, cap=256):
    avail = max(budget - fixed_bytes, per_window_bytes)
    max_blk = max(int(avail // per_window_bytes), 1)
    if xy <= min(cap, max_blk):
        return xy                                      # single full block
    blk = min(cap, max_blk, xy)
    return max(8, (blk // 8) * 8)                      # multiple of 8 (mask sublanes)


def _attention_pallas(ego_tbl, q, k, v, mask_add, rel_bias, *, heads, n, ln, d,
                      num_types):
    # ego_tbl : (B, M) int32                — ego agent types (scalar prefetch)
    # q       : (B, M, XY, heads, N, d)     bf16
    # k, v    : (T, B, XY, heads, d, LN)    bf16  (LN lane-dense, agent-major keys)
    # mask_add: (B, XY, LN)                 f32   (shared across egos)
    # rel_bias: (heads, N, LN)              f32   (grid-constant)
    B, M, XY = q.shape[:3]
    T = num_types
    scale = float(d) ** -0.5

    fixed = 2 * heads * _round_up(n, 8) * _round_up(ln, 128) * 4   # resident bias
    per_w = _per_window_vmem_bytes(heads, n, ln, d)
    xy_blk = _choose_xy_block(XY, per_w, fixed)
    XYp = _round_up(XY, xy_blk)

    q = q.reshape(B * M, XY, heads, n, d)
    k = k.reshape(T * B, XY, heads, d, ln)
    v = v.reshape(T * B, XY, heads, d, ln)
    if XYp != XY:
        pad = XYp - XY
        q = jnp.pad(q, ((0, 0), (0, pad), (0, 0), (0, 0), (0, 0)))
        k = jnp.pad(k, ((0, 0), (0, pad), (0, 0), (0, 0), (0, 0)))
        v = jnp.pad(v, ((0, 0), (0, pad), (0, 0), (0, 0), (0, 0)))
        mask_add = jnp.pad(mask_add, ((0, 0), (0, pad), (0, 0)))

    kern = functools.partial(_hetero_attn_kernel, xy_blk=xy_blk, heads=heads,
                             n=n, ln=ln, d=d, scale=scale)

    out = pl.pallas_call(
        kern,
        out_shape=jax.ShapeDtypeStruct((B * M, XYp, heads, n, d), jnp.bfloat16),
        grid_spec=pltpu.PrefetchScalarGridSpec(
            num_scalar_prefetch=1,
            grid=(B, XYp // xy_blk, M),          # M innermost: mask block resident
            in_specs=[
                pl.BlockSpec((None, xy_blk, heads, n, d),
                             lambda b, g, m, et: (b * M + m, g, 0, 0, 0)),
                pl.BlockSpec((None, xy_blk, heads, d, ln),
                             lambda b, g, m, et: (et[b, m] * B + b, g, 0, 0, 0)),
                pl.BlockSpec((None, xy_blk, heads, d, ln),
                             lambda b, g, m, et: (et[b, m] * B + b, g, 0, 0, 0)),
                pl.BlockSpec((None, xy_blk, ln),
                             lambda b, g, m, et: (b, g, 0)),
                pl.BlockSpec((heads, n, ln),
                             lambda b, g, m, et: (0, 0, 0)),
            ],
            out_specs=pl.BlockSpec((None, xy_blk, heads, n, d),
                                   lambda b, g, m, et: (b * M + m, g, 0, 0, 0)),
        ),
        compiler_params=pltpu.CompilerParams(
            dimension_semantics=("parallel", "parallel", "arbitrary"),
            vmem_limit_bytes=48 * 1024 * 1024),
    )(ego_tbl, q, k, v, mask_add, rel_bias)

    if XYp != XY:
        out = out[:, :XY]
    return out.reshape(B, M, XY, heads, n, d)


# -----------------------------------------------------------------------------
# Per-type LayerNorm / FeedForward (JAX glue).
# -----------------------------------------------------------------------------
def hetero_layer_norm(x, mode, gamma, beta, eps=1e-5):
    mu = jnp.mean(x, axis=-1, keepdims=True)
    var = jnp.mean((x - mu) ** 2, axis=-1, keepdims=True)
    xn = (x - mu) / jnp.sqrt(var + eps)
    g = gamma[mode]
    b = beta[mode]
    extra = x.ndim - 3
    g = g.reshape(g.shape[:2] + (1,) * extra + (g.shape[-1],))
    b = b.reshape(b.shape[:2] + (1,) * extra + (b.shape[-1],))
    return xn * g + b


def hetero_feed_forward(x, mode, p):
    W1, b1 = p['w1'][mode], p['b1'][mode]
    W2, b2 = p['w2'][mode], p['b2'][mode]
    h = jnp.einsum('blhwc,blcm->blhwm', x, W1) + b1[:, :, None, None, :]
    h = jax.nn.gelu(h, approximate=False)
    return jnp.einsum('blhwm,blmo->blhwo', h, W2) + b2[:, :, None, None, :]


# -----------------------------------------------------------------------------
# One spatial attention branch (local window or global grid attention).
# -----------------------------------------------------------------------------
def _spatial_attention_branch(x, mode, mask, bp, *, window_size, max_cav, split,
                              heads, dim_head, num_types):
    # x: (B, L, C, H, W); mask: (B, H, W, 1, L) with 1 = valid key
    B, L, C, H, W = x.shape
    w = window_size
    Xw, Yw = H // w, W // w
    XY, N = Xw * Yw, w * w
    M = max_cav
    LN = M * N
    p = bp['attn']

    xp = x.transpose(0, 1, 3, 4, 2)                                   # (B,L,H,W,C)
    xn = hetero_layer_norm(xp, mode, bp['norm_gamma'], bp['norm_beta'])

    # TODO(synk): identity warp stands in for SpatialTransformation + ROI/CAV mask.
    xa = xn[:, :M]                                                    # (B,M,H,W,C)
    mode_m = mode[:, :M]                                              # (B,M)

    # base Q/K/V projections, computed ONCE for all agents
    def proj(Wp, bpar):
        return (jnp.einsum('bmhwc,bmcd->bmhwd', xa, Wp[mode_m])
                + bpar[mode_m][:, :, None, None, :])

    q = proj(p['q_w'], p['q_b'])
    k = proj(p['k_w'], p['k_b'])
    v = proj(p['v_w'], p['v_b'])

    def to_windows(t):        # (B,M,H,W,C) -> (B,M,XY,N,heads,d)
        if split == 'local':  # H = (x w1), W = (y w2)
            t = t.reshape(B, M, Xw, w, Yw, w, C).transpose(0, 1, 2, 4, 3, 5, 6)
        else:                 # H = (w1 x), W = (w2 y)
            t = t.reshape(B, M, w, Xw, w, Yw, C).transpose(0, 1, 3, 5, 2, 4, 6)
        return t.reshape(B, M, XY, N, heads, dim_head)

    q_w, k_w, v_w = to_windows(q), to_windows(k), to_windows(v)

    # relation-projected K/V, one plane per possible ego TYPE; the plane used by
    # each ego agent is selected by the kernel's index_map via scalar prefetch.
    # TODO(synk): restrict planes to the types actually present if num_types grows.
    ego_types = jnp.arange(num_types)
    e_idx_all = ego_types[:, None, None] * num_types + mode_m[None]   # (T,B,M)
    wa_all = p['relation_att'][e_idx_all]                             # (T,B,M,h,d,d)
    wm_all = p['relation_msg'][e_idx_all]
    kp_all = jnp.einsum('bmgnhd,tbmhed->tbmgnhe', k_w, wa_all)        # k @ Wa^T
    vp_all = jnp.einsum('bmgnhd,tbmhde->tbmgnhe', v_w, wm_all)        # v @ Wm

    def key_layout(t):  # (T,B,M,XY,N,h,d) -> (T,B,XY,h,d,LN)  LN lane-dense
        t = t.transpose(0, 1, 3, 5, 6, 2, 4)                          # T,B,XY,h,d,M,N
        return t.reshape(num_types, B, XY, heads, dim_head, LN).astype(jnp.bfloat16)

    kk_all, vv_all = key_layout(kp_all), key_layout(vp_all)
    q_all = q_w.transpose(0, 1, 2, 4, 3, 5).astype(jnp.bfloat16)      # (B,M,XY,h,N,d)

    # compact additive key-validity mask (agent-major), shared across egos
    mvals = mask[..., 0, :M]                                          # (B,H,W,M)
    if split == 'local':
        mw = mvals.reshape(B, Xw, w, Yw, w, M).transpose(0, 1, 3, 5, 2, 4)
    else:
        mw = mvals.reshape(B, w, Xw, w, Yw, M).transpose(0, 2, 4, 5, 1, 3)
    mw = mw.reshape(B, XY, LN)
    mask_add = jnp.where(mw > 0, 0.0, -1e9).astype(jnp.float32)       # (B,XY,LN)

    # rel-pos bias tiled over agents: tiny, grid-constant (resident in VMEM)
    bias_full = jnp.tile(p['rel_bias'], (1, 1, M)).astype(jnp.float32)  # (h,N,LN)

    ego_tbl = mode_m.astype(jnp.int32)                                # (B,M)

    o = _attention_pallas(ego_tbl, q_all, kk_all, vv_all, mask_add, bias_full,
                          heads=heads, n=N, ln=LN, d=dim_head,
                          num_types=num_types)                        # (B,M,XY,h,N,d)

    # output projection with the ego agent's type; head interleave fused here
    aw = p['a_w'][mode_m].reshape(B, M, heads, dim_head, C)
    ab = p['a_b'][mode_m]
    o = (jnp.einsum('bmghnd,bmhdc->bmgnc', o.astype(jnp.float32), aw)
         + ab[:, :, None, None, :])                                   # (B,M,XY,N,C)

    # un-window back to (B, M, C, H, W)
    o = o.reshape(B, M, Xw, Yw, w, w, C)
    if split == 'local':
        o = o.transpose(0, 1, 6, 2, 4, 3, 5).reshape(B, M, C, H, W)
    else:
        o = o.transpose(0, 1, 6, 4, 2, 5, 3).reshape(B, M, C, H, W)

    upd = jnp.pad(o, ((0, 0), (0, L - M), (0, 0), (0, 0), (0, 0)))
    xr = upd + x

    # pre-norm residual feed-forward
    xp2 = xr.transpose(0, 1, 3, 4, 2)
    xn2 = hetero_layer_norm(xp2, mode, bp['ffd_norm_gamma'], bp['ffd_norm_beta'])
    xp2 = hetero_feed_forward(xn2, mode, bp['ffd']) + xp2
    return xp2.transpose(0, 1, 4, 2, 3)


def hetero_fusion_block_forward(x, pairwise_t_matrix, mode, record_len, mask,
                                params, cfg):
    del pairwise_t_matrix  # identity warp (see TODO above)
    max_cav = int(np.asarray(record_len).max())
    common = dict(window_size=cfg['window_size'], max_cav=max_cav,
                  heads=cfg['heads'], dim_head=cfg['dim_head'],
                  num_types=cfg['num_types'])
    # architect_mode == 'sequential'
    x = _spatial_attention_branch(x, mode, mask, params['window'],
                                  split='local', **common)
    x = _spatial_attention_branch(x, mode, mask, params['grid'],
                                  split='grid', **common)
    return x


# -----------------------------------------------------------------------------
# Deterministic parameter construction.
# -----------------------------------------------------------------------------
def _rel_pos_index(Wh, Ww):
    coords = np.stack(np.meshgrid(np.arange(Wh), np.arange(Ww), indexing='ij'))
    cf = coords.reshape(2, -1)
    rel = cf[:, :, None] - cf[:, None, :]
    rel = rel.transpose(1, 2, 0).copy()
    rel[:, :, 0] += Wh - 1
    rel[:, :, 1] += Ww - 1
    rel[:, :, 0] *= 2 * Wh - 1
    return rel.sum(-1)                                                # (N, N)


def _init_attention_params(key, dim, heads, dim_head, num_types, window_size):
    ks = jax.random.split(key, 11)

    def w(k, shape, s=0.05):
        return (jax.random.normal(k, shape) * s).astype(jnp.float32)

    p = dict(
        q_w=w(ks[0], (num_types, dim, dim)), q_b=w(ks[1], (num_types, dim), 0.01),
        k_w=w(ks[2], (num_types, dim, dim)), k_b=w(ks[3], (num_types, dim), 0.01),
        v_w=w(ks[4], (num_types, dim, dim)), v_b=w(ks[5], (num_types, dim), 0.01),
        a_w=w(ks[6], (num_types, dim, dim)), a_b=w(ks[7], (num_types, dim), 0.01),
        relation_att=w(ks[8], (num_types ** 2, heads, dim_head, dim_head), 0.1),
        relation_msg=w(ks[9], (num_types ** 2, heads, dim_head, dim_head), 0.1),
    )
    table = w(ks[10], ((2 * window_size - 1) * (2 * window_size - 1), heads), 0.05)
    idx = _rel_pos_index(window_size, window_size)
    p['rel_bias'] = jnp.transpose(table[idx], (2, 0, 1)).astype(jnp.float32)
    return p


def init_block_params(key, dim, dim_head, mlp_dim, num_types, window_size):
    heads = dim // dim_head

    def branch(kb):
        ks = jax.random.split(kb, 8)

        def w(k, shape, s=0.05):
            return (jax.random.normal(k, shape) * s).astype(jnp.float32)

        return dict(
            norm_gamma=1.0 + w(ks[0], (num_types, dim), 0.01),
            norm_beta=w(ks[1], (num_types, dim), 0.01),
            attn=_init_attention_params(ks[2], dim, heads, dim_head,
                                        num_types, window_size),
            ffd_norm_gamma=1.0 + w(ks[3], (num_types, dim), 0.01),
            ffd_norm_beta=w(ks[4], (num_types, dim), 0.01),
            ffd=dict(
                w1=w(ks[5], (num_types, dim, mlp_dim)),
                b1=w(ks[6], (num_types, mlp_dim), 0.01),
                w2=w(ks[7], (num_types, mlp_dim, dim)),
                b2=jnp.zeros((num_types, dim), jnp.float32),
            ),
        )

    kw, kg = jax.random.split(key)
    return dict(window=branch(kw), grid=branch(kg))


# -----------------------------------------------------------------------------
if __name__ == "__main__":
    B, L, C, H, W = 2, 2, 32, 8, 8
    window_size = 4
    dim_head = 16
    heads = C // dim_head
    mlp_dim = 32
    num_types = 2

    cfg = dict(window_size=window_size, heads=heads, dim_head=dim_head,
               num_types=num_types)

    key = jax.random.PRNGKey(0)
    k_x, k_p = jax.random.split(key)

    x = jax.random.normal(k_x, (B, L, C, H, W), jnp.float32)
    pairwise_t_matrix = jnp.tile(jnp.eye(4, dtype=jnp.float32), (B, L, L, 1, 1))
    mode = jnp.array([[0, 1], [1, 0]], jnp.int32)                 # agent types
    record_len = np.array([2, 2], np.int32)
    mask = jnp.ones((B, H, W, 1, L), jnp.float32)
    mask = mask.at[:, :, W // 2:, :, 1].set(0.0)                  # exercise masking

    params = init_block_params(k_p, C, dim_head, mlp_dim, num_types, window_size)

    out = hetero_fusion_block_forward(x, pairwise_t_matrix, mode, record_len,
                                      mask, params, cfg)
    out = jax.block_until_ready(out)
    assert out.shape == (B, L, C, H, W), out.shape
    assert bool(jnp.all(jnp.isfinite(out)))
    print("KERNEL_OK")
</pallas_src>

<mosaic_0001>
module attributes {stable_mosaic.version = 11 : i64} {
  func.func @_hetero_attn_kernel(%arg0: i32, %arg1: i32, %arg2: i32, %arg3: memref<2x2xi32, #tpu.memory_space<smem>>, %arg4: memref<1x4x2x16x16xbf16, #tpu.memory_space<vmem>>, %arg5: memref<1x4x2x16x32xbf16, #tpu.memory_space<vmem>>, %arg6: memref<1x4x2x16x32xbf16, #tpu.memory_space<vmem>>, %arg7: memref<1x4x32xf32, #tpu.memory_space<vmem>>, %arg8: memref<2x16x32xf32, #tpu.memory_space<vmem>>, %arg9: memref<1x4x2x16x16xbf16, #tpu.memory_space<vmem>>) attributes {dimension_semantics = [#tpu.dimension_semantics<parallel>, #tpu.dimension_semantics<parallel>, #tpu.dimension_semantics<arbitrary>], iteration_bounds = array<i64: 2, 1, 2>, scalar_prefetch = 1 : i64, scratch_operands = 0 : i64, tpu.core_type = #tpu.core_type<tc>, window_params = [{transform_indices = @transform_0, window_bounds = array<i64: 1, 4, 2, 16, 16>}, {transform_indices = @transform_1, window_bounds = array<i64: 1, 4, 2, 16, 32>}, {transform_indices = @transform_2, window_bounds = array<i64: 1, 4, 2, 16, 32>}, {transform_indices = @transform_3, window_bounds = array<i64: 1, 4, 32>}, {pipeline_mode = #tpu.pipeline_mode<synchronous>, transform_indices = @transform_4, window_bounds = array<i64: 2, 16, 32>}, {transform_indices = @transform_5, window_bounds = array<i64: 1, 4, 2, 16, 16>}]} {
    %c0 = arith.constant 0 : index
    %c0_0 = arith.constant 0 : index
    %c0_1 = arith.constant 0 : index
    %c0_2 = arith.constant 0 : index
    %c0_3 = arith.constant 0 : index
    %0 = vector.load %arg4[%c0, %c0_0, %c0_1, %c0_2, %c0_3] : memref<1x4x2x16x16xbf16, #tpu.memory_space<vmem>>, vector<1x4x2x16x16xbf16>
    %1 = vector.shape_cast %0 : vector<1x4x2x16x16xbf16> to vector<4x2x16x16xbf16>
    %2 = vector.shape_cast %1 : vector<4x2x16x16xbf16> to vector<8x16x16xbf16>
    %c0_4 = arith.constant 0 : index
    %c0_5 = arith.constant 0 : index
    %c0_6 = arith.constant 0 : index
    %c0_7 = arith.constant 0 : index
    %c0_8 = arith.constant 0 : index
    %3 = vector.load %arg5[%c0_4, %c0_5, %c0_6, %c0_7, %c0_8] : memref<1x4x2x16x32xbf16, #tpu.memory_space<vmem>>, vector<1x4x2x16x32xbf16>
    %4 = vector.shape_cast %3 : vector<1x4x2x16x32xbf16> to vector<4x2x16x32xbf16>
    %5 = vector.shape_cast %4 : vector<4x2x16x32xbf16> to vector<8x16x32xbf16>
    "tpu.trace_start"() <{level = 10 : i32, message = "bqd,bdk->bqk"}> : () -> ()
    %cst = arith.constant dense<0.000000e+00> : vector<8x16x32xf32>
    %6 = tpu.matmul %2, %5, %cst {dimension_numbers = #tpu.dot_dimension_numbers<[2], [1], [1], [2], [0, 0, 0, 1, 1, 2], [0], [0]>} : vector<8x16x16xbf16>, vector<8x16x32xbf16>, vector<8x16x32xf32> -> vector<8x16x32xf32>
    "tpu.trace_stop"() : () -> ()
    %7 = vector.shape_cast %6 : vector<8x16x32xf32> to vector<4x2x16x32xf32>
    %cst_9 = arith.constant 2.500000e-01 : f32
    %8 = vector.broadcast %cst_9 : f32 to vector<4x2x16x32xf32>
    %9 = arith.mulf %7, %8 : vector<4x2x16x32xf32>
    %c0_10 = arith.constant 0 : index
    %c0_11 = arith.constant 0 : index
    %c0_12 = arith.constant 0 : index
    %10 = vector.load %arg8[%c0_10, %c0_11, %c0_12] : memref<2x16x32xf32, #tpu.memory_space<vmem>>, vector<2x16x32xf32>
    %11 = vector.shape_cast %10 : vector<2x16x32xf32> to vector<1x2x16x32xf32>
    %12 = vector.broadcast %11 : vector<1x2x16x32xf32> to vector<4x2x16x32xf32>
    %13 = arith.addf %9, %12 : vector<4x2x16x32xf32>
    %c0_13 = arith.constant 0 : index
    %c0_14 = arith.constant 0 : index
    %c0_15 = arith.constant 0 : index
    %14 = vector.load %arg7[%c0_13, %c0_14, %c0_15] : memref<1x4x32xf32, #tpu.memory_space<vmem>>, vector<1x4x32xf32>
    %15 = vector.shape_cast %14 : vector<1x4x32xf32> to vector<4x32xf32>
    %16 = vector.shape_cast %15 : vector<4x32xf32> to vector<4x1x1x32xf32>
    %17 = vector.broadcast %16 : vector<4x1x1x32xf32> to vector<4x2x16x32xf32>
    %18 = arith.addf %13, %17 : vector<4x2x16x32xf32>
    %cst_16 = arith.constant dense<0xFF800000> : vector<4x2x16xf32>
    %19 = vector.multi_reduction <maximumf>, %18, %cst_16 [3] : vector<4x2x16x32xf32> to vector<4x2x16xf32>
    %20 = vector.shape_cast %19 : vector<4x2x16xf32> to vector<4x2x16x1xf32>
    %21 = vector.broadcast %20 : vector<4x2x16x1xf32> to vector<4x2x16x32xf32>
    %22 = arith.subf %18, %21 : vector<4x2x16x32xf32>
    %23 = math.exp %22 : vector<4x2x16x32xf32>
    %cst_17 = arith.constant dense<0.000000e+00> : vector<4x2x16xf32>
    %24 = vector.multi_reduction <add>, %23, %cst_17 [3] : vector<4x2x16x32xf32> to vector<4x2x16xf32>
    %25 = vector.shape_cast %24 : vector<4x2x16xf32> to vector<4x2x16x1xf32>
    %26 = tpu.reciprocal %25 {approx = true} : vector<4x2x16x1xf32> -> vector<4x2x16x1xf32>
    %27 = vector.broadcast %26 : vector<4x2x16x1xf32> to vector<4x2x16x32xf32>
    %28 = arith.mulf %23, %27 : vector<4x2x16x32xf32>
    %29 = vector.shape_cast %28 : vector<4x2x16x32xf32> to vector<8x16x32xf32>
    %30 = arith.truncf %29 : vector<8x16x32xf32> to vector<8x16x32xbf16>
    %c0_18 = arith.constant 0 : index
    %c0_19 = arith.constant 0 : index
    %c0_20 = arith.constant 0 : index
    %c0_21 = arith.constant 0 : index
    %c0_22 = arith.constant 0 : index
    %31 = vector.load %arg6[%c0_18, %c0_19, %c0_20, %c0_21, %c0_22] : memref<1x4x2x16x32xbf16, #tpu.memory_space<vmem>>, vector<1x4x2x16x32xbf16>
    %32 = vector.shape_cast %31 : vector<1x4x2x16x32xbf16> to vector<4x2x16x32xbf16>
    %33 = vector.shape_cast %32 : vector<4x2x16x32xbf16> to vector<8x16x32xbf16>
    "tpu.trace_start"() <{level = 10 : i32, message = "bqk,bdk->bqd"}> : () -> ()
    %cst_23 = arith.constant dense<0.000000e+00> : vector<8x16x16xf32>
    %34 = tpu.matmul %30, %33, %cst_23 {dimension_numbers = #tpu.dot_dimension_numbers<[2], [2], [1], [1], [0, 0, 0, 1, 1, 1], [0], [0]>} : vector<8x16x32xbf16>, vector<8x16x32xbf16>, vector<8x16x16xf32> -> vector<8x16x16xf32>
    "tpu.trace_stop"() : () -> ()
    %35 = vector.shape_cast %34 : vector<8x16x16xf32> to vector<4x2x16x16xf32>
    %36 = arith.truncf %35 : vector<4x2x16x16xf32> to vector<4x2x16x16xbf16>
    %c0_24 = arith.constant 0 : index
    %c0_25 = arith.constant 0 : index
    %c0_26 = arith.constant 0 : index
    %c0_27 = arith.constant 0 : index
    %c0_28 = arith.constant 0 : index
    %37 = vector.load %arg9[%c0_24, %c0_25, %c0_26, %c0_27, %c0_28] : memref<1x4x2x16x16xbf16, #tpu.memory_space<vmem>>, vector<1x4x2x16x16xbf16>
    %38 = vector.shape_cast %37 : vector<1x4x2x16x16xbf16> to vector<4x2x16x16xbf16>
    %39 = vector.shape_cast %36 : vector<4x2x16x16xbf16> to vector<1x4x2x16x16xbf16>
    tpu.vector_store %arg9[%c0_24, %c0_25, %c0_26, %c0_27, %c0_28], %39 {strides = array<i32>} : memref<1x4x2x16x16xbf16, #tpu.memory_space<vmem>>, vector<1x4x2x16x16xbf16>,
    return
  }
  func.func @transform_0(%arg0: i32, %arg1: i32, %arg2: i32, %arg3: memref<2x2xi32, #tpu.memory_space<smem>>) -> (i32, i32, i32, i32, i32) {
    %c2_i32 = arith.constant 2 : i32
    %0 = arith.muli %arg0, %c2_i32 : i32
    %1 = arith.addi %0, %arg2 : i32
    %c0_i32 = arith.constant 0 : i32
    %c0_i32_0 = arith.constant 0 : i32
    %c0_i32_1 = arith.constant 0 : i32
    %c0_i32_2 = arith.constant 0 : i32
    return %1, %arg1, %c0_i32, %c0_i32_0, %c0_i32_1 : i32, i32, i32, i32, i32
  }
  func.func @transform_1(%arg0: i32, %arg1: i32, %arg2: i32, %arg3: memref<2x2xi32, #tpu.memory_space<smem>>) -> (i32, i32, i32, i32, i32) {
    %0 = arith.index_cast %arg0 : i32 to index
    %1 = arith.index_cast %arg2 : i32 to index
    %2 = memref.load %arg3[%0, %1] : memref<2x2xi32, #tpu.memory_space<smem>>
    %c2_i32 = arith.constant 2 : i32
    %3 = arith.muli %2, %c2_i32 : i32
    %4 = arith.addi %3, %arg0 : i32
    %c0_i32 = arith.constant 0 : i32
    %c0_i32_0 = arith.constant 0 : i32
    %c0_i32_1 = arith.constant 0 : i32
    %c0_i32_2 = arith.constant 0 : i32
    return %4, %arg1, %c0_i32, %c0_i32_0, %c0_i32_1 : i32, i32, i32, i32, i32
  }
  func.func @transform_2(%arg0: i32, %arg1: i32, %arg2: i32, %arg3: memref<2x2xi32, #tpu.memory_space<smem>>) -> (i32, i32, i32, i32, i32) {
    %0 = arith.index_cast %arg0 : i32 to index
    %1 = arith.index_cast %arg2 : i32 to index
    %2 = memref.load %arg3[%0, %1] : memref<2x2xi32, #tpu.memory_space<smem>>
    %c2_i32 = arith.constant 2 : i32
    %3 = arith.muli %2, %c2_i32 : i32
    %4 = arith.addi %3, %arg0 : i32
    %c0_i32 = arith.constant 0 : i32
    %c0_i32_0 = arith.constant 0 : i32
    %c0_i32_1 = arith.constant 0 : i32
    %c0_i32_2 = arith.constant 0 : i32
    return %4, %arg1, %c0_i32, %c0_i32_0, %c0_i32_1 : i32, i32, i32, i32, i32
  }
  func.func @transform_3(%arg0: i32, %arg1: i32, %arg2: i32, %arg3: memref<2x2xi32, #tpu.memory_space<smem>>) -> (i32, i32, i32) {
    %c0_i32 = arith.constant 0 : i32
    %c0_i32_0 = arith.constant 0 : i32
    return %arg0, %arg1, %c0_i32 : i32, i32, i32
  }
  func.func @transform_4(%arg0: i32, %arg1: i32, %arg2: i32, %arg3: memref<2x2xi32, #tpu.memory_space<smem>>) -> (i32, i32, i32) {
    %c0_i32 = arith.constant 0 : i32
    %c0_i32_0 = arith.constant 0 : i32
    %c0_i32_1 = arith.constant 0 : i32
    %c0_i32_2 = arith.constant 0 : i32
    return %c0_i32, %c0_i32_0, %c0_i32_1 : i32, i32, i32
  }
  func.func @transform_5(%arg0: i32, %arg1: i32, %arg2: i32, %arg3: memref<2x2xi32, #tpu.memory_space<smem>>) -> (i32, i32, i32, i32, i32) {
    %c2_i32 = arith.constant 2 : i32
    %0 = arith.muli %arg0, %c2_i32 : i32
    %1 = arith.addi %0, %arg2 : i32
    %c0_i32 = arith.constant 0 : i32
    %c0_i32_0 = arith.constant 0 : i32
    %c0_i32_1 = arith.constant 0 : i32
    %c0_i32_2 = arith.constant 0 : i32
    return %1, %arg1, %c0_i32, %c0_i32_0, %c0_i32_1 : i32, i32, i32, i32, i32
  }
}

</mosaic_0001>

<llo_original>
// kernel: tpu_custom_call.1
$region0: #{tpu_custom_call.1}
  #allocation0 [shape = 'u32[]', space=smem, size = 0x4, offset = 0x4, fixed_abs, tag = 'smem constant byte address 0x4 - core index']
  #allocation1 [shape = 'u32[72,128]{1,0:T(1,128)}', space=vmem, size = 0x9000, scoped, tag = 'internal scratch']
  #allocation2 [shape = 's32[1]{0}', space=sflag, size = 0x4, scoped, tag = 'scoped memory for tpu_custom_call.1']
  #allocation3 [shape = 'u8[1024]{0}', space=smem, size = 0x400, scoped, tag = 'prefetched SMEM operand 0']
  %s0 = inlined_call_operand.hbm [shape: s32[2,2], index: 0, kind: input, shape index: {}]
  %s1 = inlined_call_operand.hbm [shape: bf16[4,4,2,16,16], index: 1, kind: input, shape index: {}]
  %s2 = inlined_call_operand.hbm [shape: bf16[4,4,2,16,32], index: 2, kind: input, shape index: {}]
  %s3 = inlined_call_operand.hbm [shape: bf16[4,4,2,16,32], index: 3, kind: input, shape index: {}]
  %s4 = inlined_call_operand.hbm [shape: f32[2,4,32], index: 4, kind: input, shape index: {}]
  %s5 = inlined_call_operand.hbm [shape: f32[2,16,32], index: 5, kind: input, shape index: {}]
  %s6 = inlined_call_operand.hbm [shape: bf16[4,4,2,16,16], index: 6, kind: output, shape index: {}]
  %s7 = sld [smem:[#allocation0]]
  $region73: #{tpu_custom_call.1} parent=0
    _
  %s9 = ssub.s32 1, %s7
  %s10 = scalar_select 0, %s9, %s7
  %s12 = sshll.u32 %s0, 4
  %s13 = int_to_ptr.hbm [resolvable:$true] %s12
  %15 = dma.hbm_to_smem %s13, 32, [#allocation3], [#allocation2]
  %17 = dma.done [#allocation2], 32
  %18 = sfence
  $region1: #{tpu_custom_call.1} parent=0
    #allocation4 [shape = 'u8[65536]{0}', space=vmem, size = 0x10000, scoped, tag = 'input window, operand 1']
    #allocation5 [shape = 's32[2]{0}', space=sflag, size = 0x8, scoped, tag = 'scoped memory for tpu_custom_call.1']
    #allocation6 [shape = 's32[2]{0}', space=sflag, size = 0x8, scoped, tag = 'scoped memory for tpu_custom_call.1']
    #allocation7 [shape = 'u8[65536]{0}', space=vmem, size = 0x10000, scoped, tag = 'input window, operand 2']
    #allocation8 [shape = 's32[2]{0}', space=sflag, size = 0x8, scoped, tag = 'scoped memory for tpu_custom_call.1']
    #allocation9 [shape = 'u8[65536]{0}', space=vmem, size = 0x10000, scoped, tag = 'input window, operand 3']
    #allocation10 [shape = 'u8[4096]{0}', space=vmem, size = 0x1000, scoped, tag = 'input window, operand 4']
    #allocation11 [shape = 's32[2]{0}', space=sflag, size = 0x8, scoped, tag = 'scoped memory for tpu_custom_call.1']
    #allocation12 [shape = 'u8[16384]{0}', space=vmem, size = 0x4000, scoped, tag = 'input window, operand 5, single buffered']
    #allocation13 [shape = 'u8[65536]{0}', space=vmem, size = 0x10000, scoped, tag = 'output window, operand 0']
    %19 = vsyncpa [#allocation5], 0
    %s20 = scalar_lea.sflag [#allocation5], 1
    %21 = vsyncpa %s20, 0
    %22 = vsyncpa [#allocation8], 0
    %s23 = scalar_lea.sflag [#allocation8], 1
    %24 = vsyncpa %s23, 0
    %25 = vsyncpa [#allocation11], 0
    %s26 = scalar_lea.sflag [#allocation11], 1
    %27 = vsyncpa %s26, 0
    %28 = vsyncpa [#allocation6], 0
    %s29 = scalar_lea.sflag [#allocation6], 1
    %30 = vsyncpa %s29, 0
    loop: start=0, step=1, limit=6
    $region2: #{tpu_custom_call.1} parent=1 // loop_pre_header
      _
    $region3: #{tpu_custom_call.1} parent=1 // loop_header
      %s32 = sphi 0, %s36
      %p33 = scmp.ge.s32.totalorder %s32, 6
      %s39 = sphi 0, %s58
      %s40 = sphi 0, %s54
      %s41 = sphi 0, %s50
      %s42 = sphi 0, %s39
      %s43 = sphi 0, %s40
      %s44 = sphi 0, %s41
      %s45 = sphi 0, %s42
      %s46 = sphi 0, %s43
      %s47 = sphi 0, %s44
      %s67 = sphi 0, %s69
      %s70 = sphi 0, %s67
      %s71 = sphi 0, %s70
      %s87 = sphi 0, %s71
      %s115 = sphi 0, %s117
      %s118 = sphi 0, %s115
      %s119 = sphi 0, %s118
      %s135 = sphi 0, %s119
      %s163 = sphi 0, %s165
      %s166 = sphi 0, %s163
      %s167 = sphi 0, %s166
      %s183 = sphi 0, %s167
      %s191 = sphi 0, %s193
      %s194 = sphi 0, %s191
      %s195 = sphi 0, %s194
      %s211 = sphi 0, %s195
      %s215 = sphi 0, %s215
      %s217 = sphi 0, %s215
      %s218 = sphi 0, %s217
      %s232 = sphi 0, %s218
      %s244 = sphi 0, %s246
      %s247 = sphi 0, %s244
      %s248 = sphi 0, %s247
      %s264 = sphi 0, %s248
    $region4: #{tpu_custom_call.1} parent=1 // loop_header_branch
      %35 = sbr.rel (%p33) target = $region8
    $region5: #{tpu_custom_call.1} parent=1 // loop_body
      %s37 = ssub.s32 %s32, 1
      %s38 = ssub.s32 %s32, 2
      %s48 = sadd.s32 1, %s41
      %p49 = scmp.ge.s32.totalorder %s48, 2
      %s50 = scalar_select %p49, 0, %s48
      %s51 = sadd.s32 1, %s40
      %s52 = scalar_select %p49, %s51, %s40
      %p53 = scmp.ge.s32.totalorder %s52, 1
      %s54 = scalar_select %p53, 0, %s52
      %s55 = sadd.s32 1, %s39
      %s56 = scalar_select %p53, %s55, %s39
      %p57 = scmp.ge.s32.totalorder %s56, 2
      %s58 = scalar_select %p57, 0, %s56
      %s59 = smul.u32 %s39, 2
      %s60 = sadd.s32 %s59, %s41
      %s61 = smul.u32 %s58, 2
      %s62 = sadd.s32 %s61, %s50
      %s63 = ssub.s32 %s60, %s62
      %s64 = ssub.s32 %s40, %s54
      %s65 = sor.u32 %s63, %s64
      %p66 = scmp.eq.s32.totalorder %s65, 0
      %s68 = sadd.s32 %s67, 1
      %s69 = scalar_select %p66, %s67, %s68
      %p72 = pneg %p66
      %p73 = scmp.eq.s32.totalorder %s32, 3
      %p74 = por %p72, %p73
      %p75 = scmp.ne.s32.totalorder %s67, %s70
      %p76 = scmp.eq.s32.totalorder %s32, 0
      %p77 = por %p75, %p76
      %p78 = scmp.ne.s32.totalorder %s67, %s70
      %p79 = scmp.eq.s32.totalorder %s37, 3
      %p80 = por %p78, %p79
      %p81 = scmp.ne.s32.totalorder %s70, %s71
      %p82 = scmp.eq.s32.totalorder %s37, 0
      %p83 = por %p81, %p82
      %p84 = scmp.ne.s32.totalorder %s70, %s71
      %p85 = scmp.eq.s32.totalorder %s38, 3
      %p86 = por %p84, %p85
      %p88 = scmp.ne.s32.totalorder %s71, %s87
      %p89 = scmp.eq.s32.totalorder %s38, 0
      %p90 = por %p88, %p89
      %s91 = sshra.s32 %s41, 7
      %s92 = sand.u32 %s41, 127
      %s93 = sadd.s32 %s91, %s39
      %s94 = smul.u32 %s93, 128
      %s95 = sshra.s32 %s41, 7
      %s96 = sand.u32 %s41, 127
      %s97 = sadd.s32 %s94, %s96
      %s98 = sld [smem:[#allocation3 + %s97]]
      %s99 = smul.u32 %s98, 2
      %s100 = sadd.s32 %s99, %s39
      %s101 = sshra.s32 %s50, 7
      %s102 = sand.u32 %s50, 127
      %s103 = sadd.s32 %s101, %s58
      %s104 = smul.u32 %s103, 128
      %s105 = sshra.s32 %s50, 7
      %s106 = sand.u32 %s50, 127
      %s107 = sadd.s32 %s104, %s106
      %s108 = sld [smem:[#allocation3 + %s107]]
      %s109 = smul.u32 %s108, 2
      %s110 = sadd.s32 %s109, %s58
      %s111 = ssub.s32 %s100, %s110
      %s112 = ssub.s32 %s40, %s54
      %s113 = sor.u32 %s111, %s112
      %p114 = scmp.eq.s32.totalorder %s113, 0
      %s116 = sadd.s32 %s115, 1
      %s117 = scalar_select %p114, %s115, %s116
      %p120 = pneg %p114
      %p121 = scmp.eq.s32.totalorder %s32, 3
      %p122 = por %p120, %p121
      %p123 = scmp.ne.s32.totalorder %s115, %s118
      %p124 = scmp.eq.s32.totalorder %s32, 0
      %p125 = por %p123, %p124
      %p126 = scmp.ne.s32.totalorder %s115, %s118
      %p127 = scmp.eq.s32.totalorder %s37, 3
      %p128 = por %p126, %p127
      %p129 = scmp.ne.s32.totalorder %s118, %s119
      %p130 = scmp.eq.s32.totalorder %s37, 0
      %p131 = por %p129, %p130
      %p132 = scmp.ne.s32.totalorder %s118, %s119
      %p133 = scmp.eq.s32.totalorder %s38, 3
      %p134 = por %p132, %p133
      %p136 = scmp.ne.s32.totalorder %s119, %s135
      %p137 = scmp.eq.s32.totalorder %s38, 0
      %p138 = por %p136, %p137
      %s139 = sshra.s32 %s41, 7
      %s140 = sand.u32 %s41, 127
      %s141 = sadd.s32 %s139, %s39
      %s142 = smul.u32 %s141, 128
      %s143 = sshra.s32 %s41, 7
      %s144 = sand.u32 %s41, 127
      %s145 = sadd.s32 %s142, %s144
      %s146 = sld [smem:[#allocation3 + %s145]]
      %s147 = smul.u32 %s146, 2
      %s148 = sadd.s32 %s147, %s39
      %s149 = sshra.s32 %s50, 7
      %s150 = sand.u32 %s50, 127
      %s151 = sadd.s32 %s149, %s58
      %s152 = smul.u32 %s151, 128
      %s153 = sshra.s32 %s50, 7
      %s154 = sand.u32 %s50, 127
      %s155 = sadd.s32 %s152, %s154
      %s156 = sld [smem:[#allocation3 + %s155]]
      %s157 = smul.u32 %s156, 2
      %s158 = sadd.s32 %s157, %s58
      %s159 = ssub.s32 %s148, %s158
      %s160 = ssub.s32 %s40, %s54
      %s161 = sor.u32 %s159, %s160
      %p162 = scmp.eq.s32.totalorder %s161, 0
      %s164 = sadd.s32 %s163, 1
      %s165 = scalar_select %p162, %s163, %s164
      %p168 = pneg %p162
      %p169 = scmp.eq.s32.totalorder %s32, 3
      %p170 = por %p168, %p169
      %p171 = scmp.ne.s32.totalorder %s163, %s166
      %p172 = scmp.eq.s32.totalorder %s32, 0
      %p173 = por %p171, %p172
      %p174 = scmp.ne.s32.totalorder %s163, %s166
      %p175 = scmp.eq.s32.totalorder %s37, 3
      %p176 = por %p174, %p175
      %p177 = scmp.ne.s32.totalorder %s166, %s167
      %p178 = scmp.eq.s32.totalorder %s37, 0
      %p179 = por %p177, %p178
      %p180 = scmp.ne.s32.totalorder %s166, %s167
      %p181 = scmp.eq.s32.totalorder %s38, 3
      %p182 = por %p180, %p181
      %p184 = scmp.ne.s32.totalorder %s167, %s183
      %p185 = scmp.eq.s32.totalorder %s38, 0
      %p186 = por %p184, %p185
      %s187 = ssub.s32 %s39, %s58
      %s188 = ssub.s32 %s40, %s54
      %s189 = sor.u32 %s187, %s188
      %p190 = scmp.eq.s32.totalorder %s189, 0
      %s192 = sadd.s32 %s191, 1
      %s193 = scalar_select %p190, %s191, %s192
      %p196 = pneg %p190
      %p197 = scmp.eq.s32.totalorder %s32, 3
      %p198 = por %p196, %p197
      %p199 = scmp.ne.s32.totalorder %s191, %s194
      %p200 = scmp.eq.s32.totalorder %s32, 0
      %p201 = por %p199, %p200
      %p202 = scmp.ne.s32.totalorder %s191, %s194
      %p203 = scmp.eq.s32.totalorder %s37, 3
      %p204 = por %p202, %p203
      %p205 = scmp.ne.s32.totalorder %s194, %s195
      %p206 = scmp.eq.s32.totalorder %s37, 0
      %p207 = por %p205, %p206
      %p208 = scmp.ne.s32.totalorder %s194, %s195
      %p209 = scmp.eq.s32.totalorder %s38, 3
      %p210 = por %p208, %p209
      %p212 = scmp.ne.s32.totalorder %s195, %s211
      %p213 = scmp.eq.s32.totalorder %s38, 0
      %p214 = por %p212, %p213
      %s216 = sadd.s32 %s215, 1
      %p219 = scmp.eq.s32.totalorder %s32, 3
      %p220 = scmp.ne.s32.totalorder %s215, %s217
      %p221 = scmp.eq.s32.totalorder %s32, 0
      %p222 = por %p220, %p221
      %p223 = scmp.ne.s32.totalorder %s215, %s217
      %p224 = scmp.eq.s32.totalorder %s37, 3
      %p225 = por %p223, %p224
      %p226 = scmp.ne.s32.totalorder %s217, %s218
      %p227 = scmp.eq.s32.totalorder %s37, 0
      %p228 = por %p226, %p227
      %p229 = scmp.ne.s32.totalorder %s217, %s218
      %p230 = scmp.eq.s32.totalorder %s38, 3
      %p231 = por %p229, %p230
      %p233 = scmp.ne.s32.totalorder %s218, %s232
      %p234 = scmp.eq.s32.totalorder %s38, 0
      %p235 = por %p233, %p234
      %s236 = smul.u32 %s39, 2
      %s237 = sadd.s32 %s236, %s41
      %s238 = smul.u32 %s58, 2
      %s239 = sadd.s32 %s238, %s50
      %s240 = ssub.s32 %s237, %s239
      %s241 = ssub.s32 %s40, %s54
      %s242 = sor.u32 %s240, %s241
      %p243 = scmp.eq.s32.totalorder %s242, 0
      %s245 = sadd.s32 %s244, 1
      %s246 = scalar_select %p243, %s244, %s245
      %p249 = pneg %p243
      %p250 = scmp.eq.s32.totalorder %s32, 3
      %p251 = por %p249, %p250
      %p252 = scmp.ne.s32.totalorder %s244, %s247
      %p253 = scmp.eq.s32.totalorder %s32, 0
      %p254 = por %p252, %p253
      %p255 = scmp.ne.s32.totalorder %s244, %s247
      %p256 = scmp.eq.s32.totalorder %s37, 3
      %p257 = por %p255, %p256
      %p258 = scmp.ne.s32.totalorder %s247, %s248
      %p259 = scmp.eq.s32.totalorder %s37, 0
      %p260 = por %p258, %p259
      %p261 = scmp.ne.s32.totalorder %s247, %s248
      %p262 = scmp.eq.s32.totalorder %s38, 3
      %p263 = por %p261, %p262
      %p265 = scmp.ne.s32.totalorder %s248, %s264
      %p266 = scmp.eq.s32.totalorder %s38, 0
      %p267 = por %p265, %p266
      %p268 = scmp.le.s32.totalorder 1, %s32
      %p269 = scmp.lt.s32.totalorder %s32, 5
      %p270 = pnand %p268, %p269
      %p271 = pneg %p270
      // Predicated region
      $region9: #{tpu_custom_call.1} parent=5 // pred_check
        _
      $region10: #{tpu_custom_call.1} parent=5 // pred_check_branch
        %273 = sbr.rel (%p270) target = $region12
      $region11: #{tpu_custom_call.1} parent=5 // pred_region
        %s274 = ssub.s32 %s32, 1
        // Predicated region
        $region13: #{tpu_custom_call.1} parent=11 // pred_check
          %p275 = pneg %p228
        $region14: #{tpu_custom_call.1} parent=11 // pred_check_branch
          %277 = sbr.rel (%p275) target = $region16
        $region15: #{tpu_custom_call.1} parent=11 // pred_region
          %279 = vsyncadd [#allocation11], 0
          %s280 = sshll.u32 %s5, 4
          %s281 = int_to_ptr.hbm [resolvable:$true] %s280
          %s282 = sshll.u32 [#allocation12], 4
          %s283 = int_to_ptr.vmem [resolvable:$true] %s282
          %288 = dma.hbm_to_vmem [thread:$0]  %s281, 512, %s283, [#allocation11], 128, 128, 8
        $region16: #{tpu_custom_call.1} parent=11 // pred_fallthru
          _
      $region12: #{tpu_custom_call.1} parent=5 // pred_fallthru
        _
      %p289 = scmp.lt.s32.totalorder %s32, 4
      // Predicated region
      $region17: #{tpu_custom_call.1} parent=5 // pred_check
        %p290 = pneg %p289
      $region18: #{tpu_custom_call.1} parent=5 // pred_check_branch
        %292 = sbr.rel (%p290) target = $region20
      $region19: #{tpu_custom_call.1} parent=5 // pred_region
        // Predicated region
        $region21: #{tpu_custom_call.1} parent=19 // pred_check
          %p293 = pneg %p77
        $region22: #{tpu_custom_call.1} parent=19 // pred_check_branch
          %295 = sbr.rel (%p293) target = $region24
        $region23: #{tpu_custom_call.1} parent=19 // pred_region
          %s296 = sand.u32 %s67, 1
          %s297 = scalar_lea.sflag [#allocation5], %s296
          %s298 = sand.u32 %s67, 1
          %s299 = smul.addr %s298, 64
          %s300 = scalar_lea.vmem [#allocation4], %s299
          %s301 = smul.u32 %s39, 2
          %s302 = sadd.s32 %s301, %s41
          %s303 = smul.u32 4, %s40
          %305 = vsyncadd %s297, 0
          %s306 = smul.addr %s303, 4
          %s307 = smul.addr %s302, 16
          %s308 = sadd.s32 %s306, %s307
          %s309 = smul.addr %s308, 4
          %s310 = scalar_lea.hbm %s1, %s309
          %s311 = sshll.u32 %s310, 4
          %s312 = int_to_ptr.hbm [resolvable:$true] %s311
          %s313 = sshll.u32 %s300, 4
          %s314 = int_to_ptr.vmem [resolvable:$true] %s313
          %319 = dma.hbm_to_vmem [thread:$0]  %s312, 1024, %s314, %s297, 64, 64, 4
        $region24: #{tpu_custom_call.1} parent=19 // pred_fallthru
          _
        // Predicated region
        $region25: #{tpu_custom_call.1} parent=19 // pred_check
          %p320 = pneg %p125
        $region26: #{tpu_custom_call.1} parent=19 // pred_check_branch
          %322 = sbr.rel (%p320) target = $region28
        $region27: #{tpu_custom_call.1} parent=19 // pred_region
          %s323 = sand.u32 %s32, 1
          %s324 = scalar_lea.sflag [#allocation8], %s323
          %s325 = sand.u32 %s115, 1
          %s326 = smul.addr %s325, 64
          %s327 = scalar_lea.vmem [#allocation7], %s326
          %s328 = sshra.s32 %s41, 7
          %s329 = sand.u32 %s41, 127
          %s330 = sadd.s32 %s328, %s39
          %s331 = smul.u32 %s330, 128
          %s332 = sshra.s32 %s41, 7
          %s333 = sand.u32 %s41, 127
          %s334 = sadd.s32 %s331, %s333
          %s335 = sld [smem:[#allocation3 + %s334]]
          %s336 = smul.u32 %s335, 2
          %s337 = sadd.s32 %s336, %s39
          %s338 = smul.u32 4, %s40
          %340 = vsyncadd %s324, 0
          %s341 = smul.addr %s338, 4
          %s342 = smul.addr %s337, 16
          %s343 = sadd.s32 %s341, %s342
          %s344 = smul.addr %s343, 4
          %s345 = scalar_lea.hbm %s2, %s344
          %s346 = sshll.u32 %s345, 4
          %s347 = int_to_ptr.hbm [resolvable:$true] %s346
          %s348 = sshll.u32 %s327, 4
          %s349 = int_to_ptr.vmem [resolvable:$true] %s348
          %354 = dma.hbm_to_vmem [thread:$0]  %s347, 1024, %s349, %s324, 64, 64, 4
        $region28: #{tpu_custom_call.1} parent=19 // pred_fallthru
          _
        // Predicated region
        $region29: #{tpu_custom_call.1} parent=19 // pred_check
          %p355 = pneg %p173
        $region30: #{tpu_custom_call.1} parent=19 // pred_check_branch
          %357 = sbr.rel (%p355) target = $region32
        $region31: #{tpu_custom_call.1} parent=19 // pred_region
          %s358 = sand.u32 %s32, 1
          %s359 = scalar_lea.sflag [#allocation8], %s358
          %s360 = sand.u32 %s163, 1
          %s361 = smul.addr %s360, 64
          %s362 = scalar_lea.vmem [#allocation9], %s361
          %s363 = sshra.s32 %s41, 7
          %s364 = sand.u32 %s41, 127
          %s365 = sadd.s32 %s363, %s39
          %s366 = smul.u32 %s365, 128
          %s367 = sshra.s32 %s41, 7
          %s368 = sand.u32 %s41, 127
          %s369 = sadd.s32 %s366, %s368
          %s370 = sld [smem:[#allocation3 + %s369]]
          %s371 = smul.u32 %s370, 2
          %s372 = sadd.s32 %s371, %s39
          %s373 = smul.u32 4, %s40
          %375 = vsyncadd %s359, 0
          %s376 = smul.addr %s373, 4
          %s377 = smul.addr %s372, 16
          %s378 = sadd.s32 %s376, %s377
          %s379 = smul.addr %s378, 4
          %s380 = scalar_lea.hbm %s3, %s379
          %s381 = sshll.u32 %s380, 4
          %s382 = int_to_ptr.hbm [resolvable:$true] %s381
          %s383 = sshll.u32 %s362, 4
          %s384 = int_to_ptr.vmem [resolvable:$true] %s383
          %389 = dma.hbm_to_vmem [thread:$0]  %s382, 1024, %s384, %s359, 64, 64, 4
        $region32: #{tpu_custom_call.1} parent=19 // pred_fallthru
          _
        // Predicated region
        $region33: #{tpu_custom_call.1} parent=19 // pred_check
          %p390 = pneg %p201
        $region34: #{tpu_custom_call.1} parent=19 // pred_check_branch
          %392 = sbr.rel (%p390) target = $region36
        $region35: #{tpu_custom_call.1} parent=19 // pred_region
          %s393 = sand.u32 %s32, 1
          %s394 = scalar_lea.sflag [#allocation11], %s393
          %s395 = sand.u32 %s191, 1
          %s396 = smul.addr %s395, 4
          %s397 = scalar_lea.vmem [#allocation10], %s396
          %399 = vsyncadd %s394, 0
          %s400 = sadd.s32 %s40, %s39
          %s401 = smul.addr %s400, 4
          %s402 = scalar_lea.hbm %s4, %s401
          %s404 = sshll.u32 %s402, 4
          %s405 = int_to_ptr.hbm [resolvable:$true] %s404
          %s406 = sshll.u32 %s397, 4
          %s407 = int_to_ptr.vmem [resolvable:$true] %s406
          %409 = dma.hbm_to_vmem [thread:$0]  %s405, 64, %s407, %s394
        $region36: #{tpu_custom_call.1} parent=19 // pred_fallthru
          _
      $region20: #{tpu_custom_call.1} parent=5 // pred_fallthru
        _
      %p410 = scmp.le.s32.totalorder 1, %s32
      %p411 = scmp.lt.s32.totalorder %s32, 5
      %p412 = pnand %p410, %p411
      %p413 = pneg %p412
      // Predicated region
      $region37: #{tpu_custom_call.1} parent=5 // pred_check
        _
      $region38: #{tpu_custom_call.1} parent=5 // pred_check_branch
        %415 = sbr.rel (%p412) target = $region40
      $region39: #{tpu_custom_call.1} parent=5 // pred_region
        %s416 = ssub.s32 %s32, 1
        %s417 = sand.u32 %s70, 1
        %s418 = scalar_lea.sflag [#allocation5], %s417
        %s419 = sand.u32 %s70, 1
        %s420 = smul.addr %s419, 64
        %s421 = scalar_lea.vmem [#allocation4], %s420
        // Predicated region
        $region41: #{tpu_custom_call.1} parent=39 // pred_check
          %p422 = pneg %p83
        $region42: #{tpu_custom_call.1} parent=39 // pred_check_branch
          %424 = sbr.rel (%p422) target = $region44
        $region43: #{tpu_custom_call.1} parent=39 // pred_region
          %426 = dma.done %s418, 1024
        $region44: #{tpu_custom_call.1} parent=39 // pred_fallthru
          _
        %s427 = sand.u32 %s37, 1
        %s428 = scalar_lea.sflag [#allocation8], %s427
        %s429 = sand.u32 %s118, 1
        %s430 = smul.addr %s429, 64
        %s431 = scalar_lea.vmem [#allocation7], %s430
        // Predicated region
        $region45: #{tpu_custom_call.1} parent=39 // pred_check
          %p432 = pneg %p131
        $region46: #{tpu_custom_call.1} parent=39 // pred_check_branch
          %434 = sbr.rel (%p432) target = $region48
        $region47: #{tpu_custom_call.1} parent=39 // pred_region
          %436 = dma.done %s428, 1024
        $region48: #{tpu_custom_call.1} parent=39 // pred_fallthru
          _
        %s437 = sand.u32 %s37, 1
        %s438 = scalar_lea.sflag [#allocation8], %s437
        %s439 = sand.u32 %s166, 1
        %s440 = smul.addr %s439, 64
        %s441 = scalar_lea.vmem [#allocation9], %s440
        // Predicated region
        $region49: #{tpu_custom_call.1} parent=39 // pred_check
          %p442 = pneg %p179
        $region50: #{tpu_custom_call.1} parent=39 // pred_check_branch
          %444 = sbr.rel (%p442) target = $region52
        $region51: #{tpu_custom_call.1} parent=39 // pred_region
          %446 = dma.done %s438, 1024
        $region52: #{tpu_custom_call.1} parent=39 // pred_fallthru
          _
        %s447 = sand.u32 %s37, 1
        %s448 = scalar_lea.sflag [#allocation11], %s447
        %s449 = sand.u32 %s194, 1
        %s450 = smul.addr %s449, 4
        %s451 = scalar_lea.vmem [#allocation10], %s450
        // Predicated region
        $region53: #{tpu_custom_call.1} parent=39 // pred_check
          %p452 = pneg %p207
        $region54: #{tpu_custom_call.1} parent=39 // pred_check_branch
          %454 = sbr.rel (%p452) target = $region56
        $region55: #{tpu_custom_call.1} parent=39 // pred_region
          %456 = dma.done %s448, 64
        $region56: #{tpu_custom_call.1} parent=39 // pred_fallthru
          _
        // Predicated region
        $region57: #{tpu_custom_call.1} parent=39 // pred_check
          %p457 = pneg %p228
        $region58: #{tpu_custom_call.1} parent=39 // pred_check_branch
          %459 = sbr.rel (%p457) target = $region60
        $region59: #{tpu_custom_call.1} parent=39 // pred_region
          %461 = dma.done [#allocation11], 512
        $region60: #{tpu_custom_call.1} parent=39 // pred_fallthru
          _
        %s462 = sand.u32 %s70, 1
        %s463 = scalar_lea.sflag [#allocation5], %s462
        %s464 = sand.u32 %s70, 1
        %s465 = smul.addr %s464, 64
        %s466 = scalar_lea.vmem [#allocation4], %s465
        %p467 = pneg %p83
        %p468 = pneg %p80
        %s469 = sand.u32 %s37, 1
        %s470 = scalar_lea.sflag [#allocation8], %s469
        %s471 = sand.u32 %s118, 1
        %s472 = smul.addr %s471, 64
        %s473 = scalar_lea.vmem [#allocation7], %s472
        %p474 = pneg %p131
        %p475 = pneg %p128
        %s476 = sand.u32 %s37, 1
        %s477 = scalar_lea.sflag [#allocation8], %s476
        %s478 = sand.u32 %s166, 1
        %s479 = smul.addr %s478, 64
        %s480 = scalar_lea.vmem [#allocation9], %s479
        %p481 = pneg %p179
        %p482 = pneg %p176
        %s483 = sand.u32 %s37, 1
        %s484 = scalar_lea.sflag [#allocation11], %s483
        %s485 = sand.u32 %s194, 1
        %s486 = smul.addr %s485, 4
        %s487 = scalar_lea.vmem [#allocation10], %s486
        %p488 = pneg %p207
        %p489 = pneg %p204
        %p490 = pneg %p228
        %p491 = pneg %p225
        %p492 = pneg %p260
        %p493 = pneg %p257
        %s494 = sand.u32 %s247, 1
        %s495 = scalar_lea.sflag [#allocation6], %s494
        %s496 = sand.u32 %s247, 1
        %s497 = smul.addr %s496, 64
        %s498 = scalar_lea.vmem [#allocation13], %s497
        %s499 = smul.u32 %s42, 2
        %s500 = sadd.s32 %s499, %s44
        %s501 = smul.u32 4, %s43
        %s502 = sshra.s32 %s44, 7
        %s503 = sand.u32 %s44, 127
        %s504 = sadd.s32 %s502, %s42
        %s505 = smul.u32 %s504, 128
        %s506 = sshra.s32 %s44, 7
        %s507 = sand.u32 %s44, 127
        %s508 = sadd.s32 %s505, %s507
        %s509 = sld [smem:[#allocation3 + %s508]]
        %s510 = smul.u32 %s509, 2
        %s511 = sadd.s32 %s510, %s42
        %s512 = smul.u32 4, %s43
        %s513 = sshra.s32 %s44, 7
        %s514 = sand.u32 %s44, 127
        %s515 = sadd.s32 %s513, %s42
        %s516 = smul.u32 %s515, 128
        %s517 = sshra.s32 %s44, 7
        %s518 = sand.u32 %s44, 127
        %s519 = sadd.s32 %s516, %s518
        %s520 = sld [smem:[#allocation3 + %s519]]
        %s521 = smul.u32 %s520, 2
        %s522 = sadd.s32 %s521, %s42
        %s523 = smul.u32 4, %s43
        %s524 = smul.u32 %s42, 2
        %s525 = sadd.s32 %s524, %s44
        %s526 = smul.u32 4, %s43
        %v528 = vld [vmem:[%s421] sm:$0xf]
        %v529 = vld [vmem:[%s421 + $0x4] sm:$0xf]
        %v530 = vld [vmem:[%s421 + $0x8] sm:$0xf]
        %v531 = vld [vmem:[%s421 + $0xc] sm:$0xf]
        %v532 = vld [vmem:[%s421 + $0x10] sm:$0xf]
        %v533 = vld [vmem:[%s421 + $0x14] sm:$0xf]
        %v534 = vld [vmem:[%s421 + $0x18] sm:$0xf]
        %v535 = vld [vmem:[%s421 + $0x1c] sm:$0xf]
        %v536 = vld [vmem:[%s421 + $0x20] sm:$0xf]
        %v537 = vld [vmem:[%s421 + $0x24] sm:$0xf]
        %v538 = vld [vmem:[%s421 + $0x28] sm:$0xf]
        %v539 = vld [vmem:[%s421 + $0x2c] sm:$0xf]
        %v540 = vld [vmem:[%s421 + $0x30] sm:$0xf]
        %v541 = vld [vmem:[%s421 + $0x34] sm:$0xf]
        %v542 = vld [vmem:[%s421 + $0x38] sm:$0xf]
        %v543 = vld [vmem:[%s421 + $0x3c] sm:$0xf]
        %v544 = vld [vmem:[%s431] sm:$0xf]
        %v545 = vld [vmem:[%s431 + $0x4] sm:$0xf]
        %v546 = vld [vmem:[%s431 + $0x8] sm:$0xf]
        %v547 = vld [vmem:[%s431 + $0xc] sm:$0xf]
        %v548 = vld [vmem:[%s431 + $0x10] sm:$0xf]
        %v549 = vld [vmem:[%s431 + $0x14] sm:$0xf]
        %v550 = vld [vmem:[%s431 + $0x18] sm:$0xf]
        %v551 = vld [vmem:[%s431 + $0x1c] sm:$0xf]
        %v552 = vld [vmem:[%s431 + $0x20] sm:$0xf]
        %v553 = vld [vmem:[%s431 + $0x24] sm:$0xf]
        %v554 = vld [vmem:[%s431 + $0x28] sm:$0xf]
        %v555 = vld [vmem:[%s431 + $0x2c] sm:$0xf]
        %v556 = vld [vmem:[%s431 + $0x30] sm:$0xf]
        %v557 = vld [vmem:[%s431 + $0x34] sm:$0xf]
        %v558 = vld [vmem:[%s431 + $0x38] sm:$0xf]
        %v559 = vld [vmem:[%s431 + $0x3c] sm:$0xf]
        %v562 = vunpack.c.l.b16 %v528
        %v563 = vunpack.c.l.b16 %v529
        %v564 = vpack.c.b16 %v563, %v562
        %v567 = vunpack.c.l.b16 %v544
        %v568 = vunpack.c.l.b16 %v545
        %v569 = vpack.c.b16 %v568, %v567
        %vm571 = vcmask 130048
        %v573 = vsel %vm571, %v564, 0
        %575 = vmatpush.bf16.msra.mxu0 0
        %576 = vmatpush.bf16.msra.mxu0 0
        %577 = vmatpush.bf16.msra.mxu0 0
        %578 = vmatpush.bf16.msra.mxu0 0
        %579 = vmatpush.bf16.msra.mxu0 0
        %580 = vmatpush.bf16.msra.mxu0 0
        %581 = vmatpush.bf16.msra.mxu0 0
        %582 = vmatpush.bf16.msra.mxu0 %v569
        %583 = vmatmul.bf16.gmra.mxu0 %v573
        %v584 = vpop.f32.mrf.mxu0
        %v585 = vadd.f32 0.0, %v584
        %v586 = vpop.f32.mrf.mxu0
        %v587 = vadd.f32 0.0, %v586
        %588 = vdwg.mxu0
        %v591 = vunpack.c.l.b16 %v530
        %v592 = vunpack.c.l.b16 %v531
        %v593 = vpack.c.b16 %v592, %v591
        %v596 = vunpack.c.l.b16 %v546
        %v597 = vunpack.c.l.b16 %v547
        %v598 = vpack.c.b16 %v597, %v596
        %v601 = vsel %vm571, %v593, 0
        %603 = vmatpush.bf16.msra.mxu0 0
        %604 = vmatpush.bf16.msra.mxu0 0
        %605 = vmatpush.bf16.msra.mxu0 0
        %606 = vmatpush.bf16.msra.mxu0 0
        %607 = vmatpush.bf16.msra.mxu0 0
        %608 = vmatpush.bf16.msra.mxu0 0
        %609 = vmatpush.bf16.msra.mxu0 0
        %610 = vmatpush.bf16.msra.mxu0 %v598
        %611 = vmatmul.bf16.gmra.mxu0 %v601
        %v612 = vpop.f32.mrf.mxu0
        %v613 = vadd.f32 0.0, %v612
        %v614 = vpop.f32.mrf.mxu0
        %v615 = vadd.f32 0.0, %v614
        %616 = vdwg.mxu0
        %v619 = vunpack.c.l.b16 %v532
        %v620 = vunpack.c.l.b16 %v533
        %v621 = vpack.c.b16 %v620, %v619
        %v624 = vunpack.c.l.b16 %v548
        %v625 = vunpack.c.l.b16 %v549
        %v626 = vpack.c.b16 %v625, %v624
        %v629 = vsel %vm571, %v621, 0
        %631 = vmatpush.bf16.msra.mxu0 0
        %632 = vmatpush.bf16.msra.mxu0 0
        %633 = vmatpush.bf16.msra.mxu0 0
        %634 = vmatpush.bf16.msra.mxu0 0
        %635 = vmatpush.bf16.msra.mxu0 0
        %636 = vmatpush.bf16.msra.mxu0 0
        %637 = vmatpush.bf16.msra.mxu0 0
        %638 = vmatpush.bf16.msra.mxu0 %v626
        %639 = vmatmul.bf16.gmra.mxu0 %v629
        %v640 = vpop.f32.mrf.mxu0
        %v641 = vadd.f32 0.0, %v640
        %v642 = vpop.f32.mrf.mxu0
        %v643 = vadd.f32 0.0, %v642
        %644 = vdwg.mxu0
        %v647 = vunpack.c.l.b16 %v534
        %v648 = vunpack.c.l.b16 %v535
        %v649 = vpack.c.b16 %v648, %v647
        %v652 = vunpack.c.l.b16 %v550
        %v653 = vunpack.c.l.b16 %v551
        %v654 = vpack.c.b16 %v653, %v652
        %v657 = vsel %vm571, %v649, 0
        %659 = vmatpush.bf16.msra.mxu0 0
        %660 = vmatpush.bf16.msra.mxu0 0
        %661 = vmatpush.bf16.msra.mxu0 0
        %662 = vmatpush.bf16.msra.mxu0 0
        %663 = vmatpush.bf16.msra.mxu0 0
        %664 = vmatpush.bf16.msra.mxu0 0
        %665 = vmatpush.bf16.msra.mxu0 0
        %666 = vmatpush.bf16.msra.mxu0 %v654
        %667 = vmatmul.bf16.gmra.mxu0 %v657
        %v668 = vpop.f32.mrf.mxu0
        %v669 = vadd.f32 0.0, %v668
        %v670 = vpop.f32.mrf.mxu0
        %v671 = vadd.f32 0.0, %v670
        %672 = vdwg.mxu0
        %v675 = vunpack.c.l.b16 %v536
        %v676 = vunpack.c.l.b16 %v537
        %v677 = vpack.c.b16 %v676, %v675
        %v680 = vunpack.c.l.b16 %v552
        %v681 = vunpack.c.l.b16 %v553
        %v682 = vpack.c.b16 %v681, %v680
        %v685 = vsel %vm571, %v677, 0
        %687 = vmatpush.bf16.msra.mxu0 0
        %688 = vmatpush.bf16.msra.mxu0 0
        %689 = vmatpush.bf16.msra.mxu0 0
        %690 = vmatpush.bf16.msra.mxu0 0
        %691 = vmatpush.bf16.msra.mxu0 0
        %692 = vmatpush.bf16.msra.mxu0 0
        %693 = vmatpush.bf16.msra.mxu0 0
        %694 = vmatpush.bf16.msra.mxu0 %v682
        %695 = vmatmul.bf16.gmra.mxu0 %v685
        %v696 = vpop.f32.mrf.mxu0
        %v697 = vadd.f32 0.0, %v696
        %v698 = vpop.f32.mrf.mxu0
        %v699 = vadd.f32 0.0, %v698
        %700 = vdwg.mxu0
        %v703 = vunpack.c.l.b16 %v538
        %v704 = vunpack.c.l.b16 %v539
        %v705 = vpack.c.b16 %v704, %v703
        %v708 = vunpack.c.l.b16 %v554
        %v709 = vunpack.c.l.b16 %v555
        %v710 = vpack.c.b16 %v709, %v708
        %v713 = vsel %vm571, %v705, 0
        %715 = vmatpush.bf16.msra.mxu0 0
        %716 = vmatpush.bf16.msra.mxu0 0
        %717 = vmatpush.bf16.msra.mxu0 0
        %718 = vmatpush.bf16.msra.mxu0 0
        %719 = vmatpush.bf16.msra.mxu0 0
        %720 = vmatpush.bf16.msra.mxu0 0
        %721 = vmatpush.bf16.msra.mxu0 0
        %722 = vmatpush.bf16.msra.mxu0 %v710
        %723 = vmatmul.bf16.gmra.mxu0 %v713
        %v724 = vpop.f32.mrf.mxu0
        %v725 = vadd.f32 0.0, %v724
        %v726 = vpop.f32.mrf.mxu0
        %v727 = vadd.f32 0.0, %v726
        %728 = vdwg.mxu0
        %v731 = vunpack.c.l.b16 %v540
        %v732 = vunpack.c.l.b16 %v541
        %v733 = vpack.c.b16 %v732, %v731
        %v736 = vunpack.c.l.b16 %v556
        %v737 = vunpack.c.l.b16 %v557
        %v738 = vpack.c.b16 %v737, %v736
        %v741 = vsel %vm571, %v733, 0
        %743 = vmatpush.bf16.msra.mxu0 0
        %744 = vmatpush.bf16.msra.mxu0 0
        %745 = vmatpush.bf16.msra.mxu0 0
        %746 = vmatpush.bf16.msra.mxu0 0
        %747 = vmatpush.bf16.msra.mxu0 0
        %748 = vmatpush.bf16.msra.mxu0 0
        %749 = vmatpush.bf16.msra.mxu0 0
        %750 = vmatpush.bf16.msra.mxu0 %v738
        %751 = vmatmul.bf16.gmra.mxu0 %v741
        %v752 = vpop.f32.mrf.mxu0
        %v753 = vadd.f32 0.0, %v752
        %v754 = vpop.f32.mrf.mxu0
        %v755 = vadd.f32 0.0, %v754
        %756 = vdwg.mxu0
        %v759 = vunpack.c.l.b16 %v542
        %v760 = vunpack.c.l.b16 %v543
        %v761 = vpack.c.b16 %v760, %v759
        %v764 = vunpack.c.l.b16 %v558
        %v765 = vunpack.c.l.b16 %v559
        %v766 = vpack.c.b16 %v765, %v764
        %v769 = vsel %vm571, %v761, 0
        %771 = vmatpush.bf16.msra.mxu0 0
        %772 = vmatpush.bf16.msra.mxu0 0
        %773 = vmatpush.bf16.msra.mxu0 0
        %774 = vmatpush.bf16.msra.mxu0 0
        %775 = vmatpush.bf16.msra.mxu0 0
        %776 = vmatpush.bf16.msra.mxu0 0
        %777 = vmatpush.bf16.msra.mxu0 0
        %778 = vmatpush.bf16.msra.mxu0 %v766
        %779 = vmatmul.bf16.gmra.mxu0 %v769
        %v780 = vpop.f32.mrf.mxu0
        %v781 = vadd.f32 0.0, %v780
        %v782 = vpop.f32.mrf.mxu0
        %v783 = vadd.f32 0.0, %v782
        %784 = vdwg.mxu0
        %v785 = vmul.f32 %v585, 0.25
        %v786 = vmul.f32 %v587, 0.25
        %v787 = vmul.f32 %v613, 0.25
        %v788 = vmul.f32 %v615, 0.25
        %v789 = vmul.f32 %v641, 0.25
        %v790 = vmul.f32 %v643, 0.25
        %v791 = vmul.f32 %v669, 0.25
        %v792 = vmul.f32 %v671, 0.25
        %v793 = vmul.f32 %v697, 0.25
        %v794 = vmul.f32 %v699, 0.25
        %v795 = vmul.f32 %v725, 0.25
        %v796 = vmul.f32 %v727, 0.25
        %v797 = vmul.f32 %v753, 0.25
        %v798 = vmul.f32 %v755, 0.25
        %v799 = vmul.f32 %v781, 0.25
        %v800 = vmul.f32 %v783, 0.25
        %v801 = vld [vmem:[#allocation12] sm:$0xff]
        %v802 = vld [vmem:[#allocation12 + $0x8] sm:$0xff]
        %v803 = vld [vmem:[#allocation12 + $0x10] sm:$0xff]
        %v804 = vld [vmem:[#allocation12 + $0x18] sm:$0xff]
        %v805 = vadd.f32 %v785, %v801
        %v806 = vadd.f32 %v786, %v802
        %v807 = vadd.f32 %v787, %v803
        %v808 = vadd.f32 %v788, %v804
        %v809 = vadd.f32 %v789, %v801
        %v810 = vadd.f32 %v790, %v802
        %v811 = vadd.f32 %v791, %v803
        %v812 = vadd.f32 %v792, %v804
        %v813 = vadd.f32 %v793, %v801
        %v814 = vadd.f32 %v794, %v802
        %v815 = vadd.f32 %v795, %v803
        %v816 = vadd.f32 %v796, %v804
        %v817 = vadd.f32 %v797, %v801
        %v818 = vadd.f32 %v798, %v802
        %v819 = vadd.f32 %v799, %v803
        %v820 = vadd.f32 %v800, %v804
        %v821 = vld [vmem:[%s451] sm:$0xf]
        %v823 = vrot.slane %v821, 1
        %v824 = vrot.slane %v821, 2
        %v825 = vrot.slane %v821, 3
        %v826 = vperm.slane %v821, 0
        %v827 = vperm.slane %v823, 0
        %v828 = vperm.slane %v824, 0
        %v829 = vperm.slane %v825, 0
        %v834 = vadd.f32 %v805, %v826
        %v835 = vadd.f32 %v806, %v826
        %v836 = vadd.f32 %v807, %v826
        %v837 = vadd.f32 %v808, %v826
        %v838 = vadd.f32 %v809, %v827
        %v839 = vadd.f32 %v810, %v827
        %v840 = vadd.f32 %v811, %v827
        %v841 = vadd.f32 %v812, %v827
        %v842 = vadd.f32 %v813, %v828
        %v843 = vadd.f32 %v814, %v828
        %v844 = vadd.f32 %v815, %v828
        %v845 = vadd.f32 %v816, %v828
        %v846 = vadd.f32 %v817, %v829
        %v847 = vadd.f32 %v818, %v829
        %v848 = vadd.f32 %v819, %v829
        %v849 = vadd.f32 %v820, %v829
        %vm850 = vcmask 261120
        %v851 = vsel %vm850, %v834, -inf
        %852 = vmax.xlane.f32.xlu0 %v851
        %v853 = vpop.xlane.xlu0 %852
        %v854 = vsel %vm850, %v835, -inf
        %855 = vmax.xlane.f32.xlu0 %v854
        %v856 = vpop.xlane.xlu0 %855
        %v857 = vsel %vm850, %v836, -inf
        %858 = vmax.xlane.f32.xlu0 %v857
        %v859 = vpop.xlane.xlu0 %858
        %v860 = vsel %vm850, %v837, -inf
        %861 = vmax.xlane.f32.xlu0 %v860
        %v862 = vpop.xlane.xlu0 %861
        %v863 = vsel %vm850, %v838, -inf
        %864 = vmax.xlane.f32.xlu0 %v863
        %v865 = vpop.xlane.xlu0 %864
        %v866 = vsel %vm850, %v839, -inf
        %867 = vmax.xlane.f32.xlu0 %v866
        %v868 = vpop.xlane.xlu0 %867
        %v869 = vsel %vm850, %v840, -inf
        %870 = vmax.xlane.f32.xlu0 %v869
        %v871 = vpop.xlane.xlu0 %870
        %v872 = vsel %vm850, %v841, -inf
        %873 = vmax.xlane.f32.xlu0 %v872
        %v874 = vpop.xlane.xlu0 %873
        %v875 = vsel %vm850, %v842, -inf
        %876 = vmax.xlane.f32.xlu0 %v875
        %v877 = vpop.xlane.xlu0 %876
        %v878 = vsel %vm850, %v843, -inf
        %879 = vmax.xlane.f32.xlu0 %v878
        %v880 = vpop.xlane.xlu0 %879
        %v881 = vsel %vm850, %v844, -inf
        %882 = vmax.xlane.f32.xlu0 %v881
        %v883 = vpop.xlane.xlu0 %882
        %v884 = vsel %vm850, %v845, -inf
        %885 = vmax.xlane.f32.xlu0 %v884
        %v886 = vpop.xlane.xlu0 %885
        %v887 = vsel %vm850, %v846, -inf
        %888 = vmax.xlane.f32.xlu0 %v887
        %v889 = vpop.xlane.xlu0 %888
        %v890 = vsel %vm850, %v847, -inf
        %891 = vmax.xlane.f32.xlu0 %v890
        %v892 = vpop.xlane.xlu0 %891
        %v893 = vsel %vm850, %v848, -inf
        %894 = vmax.xlane.f32.xlu0 %v893
        %v895 = vpop.xlane.xlu0 %894
        %v896 = vsel %vm850, %v849, -inf
        %897 = vmax.xlane.f32.xlu0 %v896
        %v898 = vpop.xlane.xlu0 %897
        %v899 = vsub.f32 %v834, %v853
        %v900 = vsub.f32 %v835, %v856
        %v901 = vsub.f32 %v836, %v859
        %v902 = vsub.f32 %v837, %v862
        %v903 = vsub.f32 %v838, %v865
        %v904 = vsub.f32 %v839, %v868
        %v905 = vsub.f32 %v840, %v871
        %v906 = vsub.f32 %v841, %v874
        %v907 = vsub.f32 %v842, %v877
        %v908 = vsub.f32 %v843, %v880
        %v909 = vsub.f32 %v844, %v883
        %v910 = vsub.f32 %v845, %v886
        %v911 = vsub.f32 %v846, %v889
        %v912 = vsub.f32 %v847, %v892
        %v913 = vsub.f32 %v848, %v895
        %v914 = vsub.f32 %v849, %v898
        %v915 = vmul.f32 %v899, 1.442695
        %v916 = vpow.pop %v915
        %v917 = vmul.f32 %v900, 1.442695
        %v918 = vpow.pop %v917
        %v919 = vmul.f32 %v901, 1.442695
        %v920 = vpow.pop %v919
        %v921 = vmul.f32 %v902, 1.442695
        %v922 = vpow.pop %v921
        %v923 = vmul.f32 %v903, 1.442695
        %v924 = vpow.pop %v923
        %v925 = vmul.f32 %v904, 1.442695
        %v926 = vpow.pop %v925
        %v927 = vmul.f32 %v905, 1.442695
        %v928 = vpow.pop %v927
        %v929 = vmul.f32 %v906, 1.442695
        %v930 = vpow.pop %v929
        %v931 = vmul.f32 %v907, 1.442695
        %v932 = vpow.pop %v931
        %v933 = vmul.f32 %v908, 1.442695
        %v934 = vpow.pop %v933
        %v935 = vmul.f32 %v909, 1.442695
        %v936 = vpow.pop %v935
        %v937 = vmul.f32 %v910, 1.442695
        %v938 = vpow.pop %v937
        %v939 = vmul.f32 %v911, 1.442695
        %v940 = vpow.pop %v939
        %v941 = vmul.f32 %v912, 1.442695
        %v942 = vpow.pop %v941
        %v943 = vmul.f32 %v913, 1.442695
        %v944 = vpow.pop %v943
        %v945 = vmul.f32 %v914, 1.442695
        %v946 = vpow.pop %v945
        %v947 = vsel %vm850, %v916, 0.0
        %948 = vadd.xlane.f32.xlu0 %v947
        %v949 = vpop.xlane.xlu0 %948
        %v950 = vsel %vm850, %v918, 0.0
        %951 = vadd.xlane.f32.xlu0 %v950
        %v952 = vpop.xlane.xlu0 %951
        %v953 = vsel %vm850, %v920, 0.0
        %954 = vadd.xlane.f32.xlu0 %v953
        %v955 = vpop.xlane.xlu0 %954
        %v956 = vsel %vm850, %v922, 0.0
        %957 = vadd.xlane.f32.xlu0 %v956
        %v958 = vpop.xlane.xlu0 %957
        %v959 = vsel %vm850, %v924, 0.0
        %960 = vadd.xlane.f32.xlu0 %v959
        %v961 = vpop.xlane.xlu0 %960
        %v962 = vsel %vm850, %v926, 0.0
        %963 = vadd.xlane.f32.xlu0 %v962
        %v964 = vpop.xlane.xlu0 %963
        %v965 = vsel %vm850, %v928, 0.0
        %966 = vadd.xlane.f32.xlu0 %v965
        %v967 = vpop.xlane.xlu0 %966
        %v968 = vsel %vm850, %v930, 0.0
        %969 = vadd.xlane.f32.xlu0 %v968
        %v970 = vpop.xlane.xlu0 %969
        %v971 = vsel %vm850, %v932, 0.0
        %972 = vadd.xlane.f32.xlu0 %v971
        %v973 = vpop.xlane.xlu0 %972
        %v974 = vsel %vm850, %v934, 0.0
        %975 = vadd.xlane.f32.xlu0 %v974
        %v976 = vpop.xlane.xlu0 %975
        %v977 = vsel %vm850, %v936, 0.0
        %978 = vadd.xlane.f32.xlu0 %v977
        %v979 = vpop.xlane.xlu0 %978
        %v980 = vsel %vm850, %v938, 0.0
        %981 = vadd.xlane.f32.xlu0 %v980
        %v982 = vpop.xlane.xlu0 %981
        %v983 = vsel %vm850, %v940, 0.0
        %984 = vadd.xlane.f32.xlu0 %v983
        %v985 = vpop.xlane.xlu0 %984
        %v986 = vsel %vm850, %v942, 0.0
        %987 = vadd.xlane.f32.xlu0 %v986
        %v988 = vpop.xlane.xlu0 %987
        %v989 = vsel %vm850, %v944, 0.0
        %990 = vadd.xlane.f32.xlu0 %v989
        %v991 = vpop.xlane.xlu0 %990
        %v992 = vsel %vm850, %v946, 0.0
        %993 = vadd.xlane.f32.xlu0 %v992
        %v994 = vpop.xlane.xlu0 %993
        %v995 = vrcp.pop %v949
        %v996 = vrcp.pop %v952
        %v997 = vrcp.pop %v955
        %v998 = vrcp.pop %v958
        %v999 = vrcp.pop %v961
        %v1000 = vrcp.pop %v964
        %v1001 = vrcp.pop %v967
        %v1002 = vrcp.pop %v970
        %v1003 = vrcp.pop %v973
        %v1004 = vrcp.pop %v976
        %v1005 = vrcp.pop %v979
        %v1006 = vrcp.pop %v982
        %v1007 = vrcp.pop %v985
        %v1008 = vrcp.pop %v988
        %v1009 = vrcp.pop %v991
        %v1010 = vrcp.pop %v994
        %v1011 = vmul.f32 %v916, %v995
        %v1012 = vmul.f32 %v918, %v996
        %v1013 = vmul.f32 %v920, %v997
        %v1014 = vmul.f32 %v922, %v998
        %v1015 = vmul.f32 %v924, %v999
        %v1016 = vmul.f32 %v926, %v1000
        %v1017 = vmul.f32 %v928, %v1001
        %v1018 = vmul.f32 %v930, %v1002
        %v1019 = vmul.f32 %v932, %v1003
        %v1020 = vmul.f32 %v934, %v1004
        %v1021 = vmul.f32 %v936, %v1005
        %v1022 = vmul.f32 %v938, %v1006
        %v1023 = vmul.f32 %v940, %v1007
        %v1024 = vmul.f32 %v942, %v1008
        %v1025 = vmul.f32 %v944, %v1009
        %v1026 = vmul.f32 %v946, %v1010
        %v1027 = vpack.c.bf16 %v1011, %v1011
        %v1028 = vpack.c.bf16 %v1012, %v1012
        %v1029 = vpack.c.bf16 %v1013, %v1013
        %v1030 = vpack.c.bf16 %v1014, %v1014
        %v1031 = vpack.c.bf16 %v1015, %v1015
        %v1032 = vpack.c.bf16 %v1016, %v1016
        %v1033 = vpack.c.bf16 %v1017, %v1017
        %v1034 = vpack.c.bf16 %v1018, %v1018
        %v1035 = vpack.c.bf16 %v1019, %v1019
        %v1036 = vpack.c.bf16 %v1020, %v1020
        %v1037 = vpack.c.bf16 %v1021, %v1021
        %v1038 = vpack.c.bf16 %v1022, %v1022
        %v1039 = vpack.c.bf16 %v1023, %v1023
        %v1040 = vpack.c.bf16 %v1024, %v1024
        %v1041 = vpack.c.bf16 %v1025, %v1025
        %v1042 = vpack.c.bf16 %v1026, %v1026
        %v1043 = vld [vmem:[%s441] sm:$0xf]
        %v1044 = vld [vmem:[%s441 + $0x4] sm:$0xf]
        %v1045 = vld [vmem:[%s441 + $0x8] sm:$0xf]
        %v1046 = vld [vmem:[%s441 + $0xc] sm:$0xf]
        %v1047 = vld [vmem:[%s441 + $0x10] sm:$0xf]
        %v1048 = vld [vmem:[%s441 + $0x14] sm:$0xf]
        %v1049 = vld [vmem:[%s441 + $0x18] sm:$0xf]
        %v1050 = vld [vmem:[%s441 + $0x1c] sm:$0xf]
        %v1051 = vld [vmem:[%s441 + $0x20] sm:$0xf]
        %v1052 = vld [vmem:[%s441 + $0x24] sm:$0xf]
        %v1053 = vld [vmem:[%s441 + $0x28] sm:$0xf]
        %v1054 = vld [vmem:[%s441 + $0x2c] sm:$0xf]
        %v1055 = vld [vmem:[%s441 + $0x30] sm:$0xf]
        %v1056 = vld [vmem:[%s441 + $0x34] sm:$0xf]
        %v1057 = vld [vmem:[%s441 + $0x38] sm:$0xf]
        %v1058 = vld [vmem:[%s441 + $0x3c] sm:$0xf]
        %v1061 = vunpack.c.l.b16 %v1027
        %v1062 = vunpack.c.l.b16 %v1028
        %v1063 = vpack.c.b16 %v1062, %v1061
        %v1066 = vunpack.c.l.b16 %v1043
        %v1067 = vunpack.c.l.b16 %v1044
        %v1068 = vpack.c.b16 %v1067, %v1066
        %v1070 = vsel %vm850, %v1063, 0
        %v1073 = vsel %vm850, %v1068, 0
        %1075 = vmatpush.bf16.xpose.msra.mxu0 0
        %1076 = vmatpush.bf16.xpose.msra.mxu0 0
        %1077 = vmatpush.bf16.xpose.msra.mxu0 0
        %1078 = vmatpush.bf16.xpose.msra.mxu0 0
        %1079 = vmatpush.bf16.xpose.msra.mxu0 0
        %1080 = vmatpush.bf16.xpose.msra.mxu0 0
        %1081 = vmatpush.bf16.xpose.msra.mxu0 0
        %1082 = vmatpush.bf16.xpose.msra.mxu0 %v1073
        %1083 = vmatmul.bf16.gmra.mxu0 %v1070
        %v1084 = vpop.f32.mrf.mxu0
        %v1085 = vadd.f32 0.0, %v1084
        %v1086 = vpop.f32.mrf.mxu0
        %v1087 = vadd.f32 0.0, %v1086
        %1088 = vdwg.mxu0
        %v1091 = vunpack.c.l.b16 %v1029
        %v1092 = vunpack.c.l.b16 %v1030
        %v1093 = vpack.c.b16 %v1092, %v1091
        %v1096 = vunpack.c.l.b16 %v1045
        %v1097 = vunpack.c.l.b16 %v1046
        %v1098 = vpack.c.b16 %v1097, %v1096
        %v1100 = vsel %vm850, %v1093, 0
        %v1103 = vsel %vm850, %v1098, 0
        %1105 = vmatpush.bf16.xpose.msra.mxu0 0
        %1106 = vmatpush.bf16.xpose.msra.mxu0 0
        %1107 = vmatpush.bf16.xpose.msra.mxu0 0
        %1108 = vmatpush.bf16.xpose.msra.mxu0 0
        %1109 = vmatpush.bf16.xpose.msra.mxu0 0
        %1110 = vmatpush.bf16.xpose.msra.mxu0 0
        %1111 = vmatpush.bf16.xpose.msra.mxu0 0
        %1112 = vmatpush.bf16.xpose.msra.mxu0 %v1103
        %1113 = vmatmul.bf16.gmra.mxu0 %v1100
        %v1114 = vpop.f32.mrf.mxu0
        %v1115 = vadd.f32 0.0, %v1114
        %v1116 = vpop.f32.mrf.mxu0
        %v1117 = vadd.f32 0.0, %v1116
        %1118 = vdwg.mxu0
        %v1121 = vunpack.c.l.b16 %v1031
        %v1122 = vunpack.c.l.b16 %v1032
        %v1123 = vpack.c.b16 %v1122, %v1121
        %v1126 = vunpack.c.l.b16 %v1047
        %v1127 = vunpack.c.l.b16 %v1048
        %v1128 = vpack.c.b16 %v1127, %v1126
        %v1130 = vsel %vm850, %v1123, 0
        %v1133 = vsel %vm850, %v1128, 0
        %1135 = vmatpush.bf16.xpose.msra.mxu0 0
        %1136 = vmatpush.bf16.xpose.msra.mxu0 0
        %1137 = vmatpush.bf16.xpose.msra.mxu0 0
        %1138 = vmatpush.bf16.xpose.msra.mxu0 0
        %1139 = vmatpush.bf16.xpose.msra.mxu0 0
        %1140 = vmatpush.bf16.xpose.msra.mxu0 0
        %1141 = vmatpush.bf16.xpose.msra.mxu0 0
        %1142 = vmatpush.bf16.xpose.msra.mxu0 %v1133
        %1143 = vmatmul.bf16.gmra.mxu0 %v1130
        %v1144 = vpop.f32.mrf.mxu0
        %v1145 = vadd.f32 0.0, %v1144
        %v1146 = vpop.f32.mrf.mxu0
        %v1147 = vadd.f32 0.0, %v1146
        %1148 = vdwg.mxu0
        %v1151 = vunpack.c.l.b16 %v1033
        %v1152 = vunpack.c.l.b16 %v1034
        %v1153 = vpack.c.b16 %v1152, %v1151
        %v1156 = vunpack.c.l.b16 %v1049
        %v1157 = vunpack.c.l.b16 %v1050
        %v1158 = vpack.c.b16 %v1157, %v1156
        %v1160 = vsel %vm850, %v1153, 0
        %v1163 = vsel %vm850, %v1158, 0
        %1165 = vmatpush.bf16.xpose.msra.mxu0 0
        %1166 = vmatpush.bf16.xpose.msra.mxu0 0
        %1167 = vmatpush.bf16.xpose.msra.mxu0 0
        %1168 = vmatpush.bf16.xpose.msra.mxu0 0
        %1169 = vmatpush.bf16.xpose.msra.mxu0 0
        %1170 = vmatpush.bf16.xpose.msra.mxu0 0
        %1171 = vmatpush.bf16.xpose.msra.mxu0 0
        %1172 = vmatpush.bf16.xpose.msra.mxu0 %v1163
        %1173 = vmatmul.bf16.gmra.mxu0 %v1160
        %v1174 = vpop.f32.mrf.mxu0
        %v1175 = vadd.f32 0.0, %v1174
        %v1176 = vpop.f32.mrf.mxu0
        %v1177 = vadd.f32 0.0, %v1176
        %1178 = vdwg.mxu0
        %v1181 = vunpack.c.l.b16 %v1035
        %v1182 = vunpack.c.l.b16 %v1036
        %v1183 = vpack.c.b16 %v1182, %v1181
        %v1186 = vunpack.c.l.b16 %v1051
        %v1187 = vunpack.c.l.b16 %v1052
        %v1188 = vpack.c.b16 %v1187, %v1186
        %v1190 = vsel %vm850, %v1183, 0
        %v1193 = vsel %vm850, %v1188, 0
        %1195 = vmatpush.bf16.xpose.msra.mxu0 0
        %1196 = vmatpush.bf16.xpose.msra.mxu0 0
        %1197 = vmatpush.bf16.xpose.msra.mxu0 0
        %1198 = vmatpush.bf16.xpose.msra.mxu0 0
        %1199 = vmatpush.bf16.xpose.msra.mxu0 0
        %1200 = vmatpush.bf16.xpose.msra.mxu0 0
        %1201 = vmatpush.bf16.xpose.msra.mxu0 0
        %1202 = vmatpush.bf16.xpose.msra.mxu0 %v1193
        %1203 = vmatmul.bf16.gmra.mxu0 %v1190
        %v1204 = vpop.f32.mrf.mxu0
        %v1205 = vadd.f32 0.0, %v1204
        %v1206 = vpop.f32.mrf.mxu0
        %v1207 = vadd.f32 0.0, %v1206
        %1208 = vdwg.mxu0
        %v1211 = vunpack.c.l.b16 %v1037
        %v1212 = vunpack.c.l.b16 %v1038
        %v1213 = vpack.c.b16 %v1212, %v1211
        %v1216 = vunpack.c.l.b16 %v1053
        %v1217 = vunpack.c.l.b16 %v1054
        %v1218 = vpack.c.b16 %v1217, %v1216
        %v1220 = vsel %vm850, %v1213, 0
        %v1223 = vsel %vm850, %v1218, 0
        %1225 = vmatpush.bf16.xpose.msra.mxu0 0
        %1226 = vmatpush.bf16.xpose.msra.mxu0 0
        %1227 = vmatpush.bf16.xpose.msra.mxu0 0
        %1228 = vmatpush.bf16.xpose.msra.mxu0 0
        %1229 = vmatpush.bf16.xpose.msra.mxu0 0
        %1230 = vmatpush.bf16.xpose.msra.mxu0 0
        %1231 = vmatpush.bf16.xpose.msra.mxu0 0
        %1232 = vmatpush.bf16.xpose.msra.mxu0 %v1223
        %1233 = vmatmul.bf16.gmra.mxu0 %v1220
        %v1234 = vpop.f32.mrf.mxu0
        %v1235 = vadd.f32 0.0, %v1234
        %v1236 = vpop.f32.mrf.mxu0
        %v1237 = vadd.f32 0.0, %v1236
        %1238 = vdwg.mxu0
        %v1241 = vunpack.c.l.b16 %v1039
        %v1242 = vunpack.c.l.b16 %v1040
        %v1243 = vpack.c.b16 %v1242, %v1241
        %v1246 = vunpack.c.l.b16 %v1055
        %v1247 = vunpack.c.l.b16 %v1056
        %v1248 = vpack.c.b16 %v1247, %v1246
        %v1250 = vsel %vm850, %v1243, 0
        %v1253 = vsel %vm850, %v1248, 0
        %1255 = vmatpush.bf16.xpose.msra.mxu0 0
        %1256 = vmatpush.bf16.xpose.msra.mxu0 0
        %1257 = vmatpush.bf16.xpose.msra.mxu0 0
        %1258 = vmatpush.bf16.xpose.msra.mxu0 0
        %1259 = vmatpush.bf16.xpose.msra.mxu0 0
        %1260 = vmatpush.bf16.xpose.msra.mxu0 0
        %1261 = vmatpush.bf16.xpose.msra.mxu0 0
        %1262 = vmatpush.bf16.xpose.msra.mxu0 %v1253
        %1263 = vmatmul.bf16.gmra.mxu0 %v1250
        %v1264 = vpop.f32.mrf.mxu0
        %v1265 = vadd.f32 0.0, %v1264
        %v1266 = vpop.f32.mrf.mxu0
        %v1267 = vadd.f32 0.0, %v1266
        %1268 = vdwg.mxu0
        %v1271 = vunpack.c.l.b16 %v1041
        %v1272 = vunpack.c.l.b16 %v1042
        %v1273 = vpack.c.b16 %v1272, %v1271
        %v1276 = vunpack.c.l.b16 %v1057
        %v1277 = vunpack.c.l.b16 %v1058
        %v1278 = vpack.c.b16 %v1277, %v1276
        %v1280 = vsel %vm850, %v1273, 0
        %v1283 = vsel %vm850, %v1278, 0
        %1285 = vmatpush.bf16.xpose.msra.mxu0 0
        %1286 = vmatpush.bf16.xpose.msra.mxu0 0
        %1287 = vmatpush.bf16.xpose.msra.mxu0 0
        %1288 = vmatpush.bf16.xpose.msra.mxu0 0
        %1289 = vmatpush.bf16.xpose.msra.mxu0 0
        %1290 = vmatpush.bf16.xpose.msra.mxu0 0
        %1291 = vmatpush.bf16.xpose.msra.mxu0 0
        %1292 = vmatpush.bf16.xpose.msra.mxu0 %v1283
        %1293 = vmatmul.bf16.gmra.mxu0 %v1280
        %v1294 = vpop.f32.mrf.mxu0
        %v1295 = vadd.f32 0.0, %v1294
        %v1296 = vpop.f32.mrf.mxu0
        %v1297 = vadd.f32 0.0, %v1296
        %1298 = vdwg.mxu0
        %v1299 = vpack.c.bf16 %v1085, %v1085
        %v1300 = vpack.c.bf16 %v1087, %v1087
        %v1301 = vpack.c.bf16 %v1115, %v1115
        %v1302 = vpack.c.bf16 %v1117, %v1117
        %v1303 = vpack.c.bf16 %v1145, %v1145
        %v1304 = vpack.c.bf16 %v1147, %v1147
        %v1305 = vpack.c.bf16 %v1175, %v1175
        %v1306 = vpack.c.bf16 %v1177, %v1177
        %v1307 = vpack.c.bf16 %v1205, %v1205
        %v1308 = vpack.c.bf16 %v1207, %v1207
        %v1309 = vpack.c.bf16 %v1235, %v1235
        %v1310 = vpack.c.bf16 %v1237, %v1237
        %v1311 = vpack.c.bf16 %v1265, %v1265
        %v1312 = vpack.c.bf16 %v1267, %v1267
        %v1313 = vpack.c.bf16 %v1295, %v1295
        %v1314 = vpack.c.bf16 %v1297, %v1297
        %vm1315 = vcmask 125952
        %1316 = vst.msk [vmem:[%s498] sm:$0xf] %vm1315, %v1299
        %1317 = vst.msk [vmem:[%s498 + $0x4] sm:$0xf] %vm1315, %v1300
        %1318 = vst.msk [vmem:[%s498 + $0x8] sm:$0xf] %vm1315, %v1301
        %1319 = vst.msk [vmem:[%s498 + $0xc] sm:$0xf] %vm1315, %v1302
        %1320 = vst.msk [vmem:[%s498 + $0x10] sm:$0xf] %vm1315, %v1303
        %1321 = vst.msk [vmem:[%s498 + $0x14] sm:$0xf] %vm1315, %v1304
        %1322 = vst.msk [vmem:[%s498 + $0x18] sm:$0xf] %vm1315, %v1305
        %1323 = vst.msk [vmem:[%s498 + $0x1c] sm:$0xf] %vm1315, %v1306
        %1324 = vst.msk [vmem:[%s498 + $0x20] sm:$0xf] %vm1315, %v1307
        %1325 = vst.msk [vmem:[%s498 + $0x24] sm:$0xf] %vm1315, %v1308
        %1326 = vst.msk [vmem:[%s498 + $0x28] sm:$0xf] %vm1315, %v1309
        %1327 = vst.msk [vmem:[%s498 + $0x2c] sm:$0xf] %vm1315, %v1310
        %1328 = vst.msk [vmem:[%s498 + $0x30] sm:$0xf] %vm1315, %v1311
        %1329 = vst.msk [vmem:[%s498 + $0x34] sm:$0xf] %vm1315, %v1312
        %1330 = vst.msk [vmem:[%s498 + $0x38] sm:$0xf] %vm1315, %v1313
        %1331 = vst.msk [vmem:[%s498 + $0x3c] sm:$0xf] %vm1315, %v1314
        %s1332 = sand.u32 %s247, 1
        %s1333 = scalar_lea.sflag [#allocation6], %s1332
        %s1334 = sand.u32 %s247, 1
        %s1335 = smul.addr %s1334, 64
        %s1336 = scalar_lea.vmem [#allocation13], %s1335
        // Predicated region
        $region61: #{tpu_custom_call.1} parent=39 // pred_check
          %p1337 = pneg %p257
        $region62: #{tpu_custom_call.1} parent=39 // pred_check_branch
          %1339 = sbr.rel (%p1337) target = $region64
        $region63: #{tpu_custom_call.1} parent=39 // pred_region
          %s1340 = smul.u32 %s42, 2
          %s1341 = sadd.s32 %s1340, %s44
          %s1342 = smul.u32 4, %s43
          %1344 = vsyncadd %s1333, 0
          %s1345 = smul.addr %s1342, 4
          %s1346 = smul.addr %s1341, 16
          %s1347 = sadd.s32 %s1345, %s1346
          %s1348 = smul.addr %s1347, 4
          %s1349 = scalar_lea.hbm %s6, %s1348
          %s1350 = sshll.u32 %s1336, 4
          %s1351 = int_to_ptr.vmem [resolvable:$true] %s1350
          %s1352 = sshll.u32 %s1349, 4
          %s1353 = int_to_ptr.hbm [resolvable:$true] %s1352
          %1358 = dma.vmem_to_hbm [thread:$0]  %s1351, 1024, %s1353, %s1333, 64, 64, 4
        $region64: #{tpu_custom_call.1} parent=39 // pred_fallthru
          _
      $region40: #{tpu_custom_call.1} parent=5 // pred_fallthru
        _
      %p1359 = scmp.le.s32.totalorder 2, %s32
      // Predicated region
      $region65: #{tpu_custom_call.1} parent=5 // pred_check
        %p1360 = pneg %p1359
      $region66: #{tpu_custom_call.1} parent=5 // pred_check_branch
        %1362 = sbr.rel (%p1360) target = $region68
      $region67: #{tpu_custom_call.1} parent=5 // pred_region
        %s1363 = ssub.s32 %s32, 2
        // Predicated region
        $region69: #{tpu_custom_call.1} parent=67 // pred_check
          %p1364 = pneg %p263
        $region70: #{tpu_custom_call.1} parent=67 // pred_check_branch
          %1366 = sbr.rel (%p1364) target = $region72
        $region71: #{tpu_custom_call.1} parent=67 // pred_region
          %s1367 = sand.u32 %s248, 1
          %s1368 = scalar_lea.sflag [#allocation6], %s1367
          %s1369 = sand.u32 %s248, 1
          %s1370 = smul.addr %s1369, 64
          %s1371 = scalar_lea.vmem [#allocation13], %s1370
          %1373 = dma.done %s1368, 1024
        $region72: #{tpu_custom_call.1} parent=67 // pred_fallthru
          _
      $region68: #{tpu_custom_call.1} parent=5 // pred_fallthru
        _
    $region6: #{tpu_custom_call.1} parent=1 // loop_footer
      %s36 = sadd.s32 1, %s32
    $region7: #{tpu_custom_call.1} parent=1 // loop_footer_branch
      %31 = sbr.rel target = $region3
    $region8: #{tpu_custom_call.1} parent=1 // loop_exit
      _
    %1374 = vsyncpa [#allocation5], 1
    %s1375 = scalar_lea.sflag [#allocation5], 1
    %1376 = vsyncpa %s1375, 1
    %1377 = vsyncpa [#allocation8], 1
    %s1378 = scalar_lea.sflag [#allocation8], 1
    %1379 = vsyncpa %s1378, 1
    %1380 = vsyncpa [#allocation11], 1
    %s1381 = scalar_lea.sflag [#allocation11], 1
    %1382 = vsyncpa %s1381, 1
    %1383 = vsyncpa [#allocation6], 1
    %s1384 = scalar_lea.sflag [#allocation6], 1
    %1385 = vsyncpa %s1384, 1

</llo_original>
